<compile_context>
chip_gen: v7x
topology: tpu7x:2x2x1
jax: 0.10.0
libtpu: 0.0.40
codegen_flags: <defaults>
</compile_context>

<pallas_src>
import jax
import jax.numpy as jnp
from jax.experimental import pallas as pl
from jax.experimental.pallas import tpu as pltpu


def _ceil_to(x, m):
    return ((x + m - 1) // m) * m


def _pack_weight_slab(named, lane_width, dtype, row_align=16):
    """Row-stack 2-D weights, each padded to `row_align` rows x `lane_width` lanes."""
    blocks, layout, off = [], {}, 0
    for name, a in named:
        r, c = int(a.shape[0]), int(a.shape[1])
        rp = _ceil_to(r, row_align)
        blk = jnp.zeros((rp, lane_width), dtype).at[:r, :c].set(a.astype(dtype))
        blocks.append(blk)
        layout[name] = (off, r, c)
        off += rp
    return jnp.concatenate(blocks, axis=0), layout


def _pack_bias_slab(named, lane_width):
    """One bias vector per row of a single f32 (rows, lane_width) slab."""
    rows = _ceil_to(len(named), 8)
    slab = jnp.zeros((rows, lane_width), jnp.float32)
    layout = {}
    for i, (name, b) in enumerate(named):
        c = int(b.shape[0])
        slab = slab.at[i, :c].set(b.astype(jnp.float32))
        layout[name] = (i, c)
    return slab, layout


def _make_kernel(w_layout, b_layout, num_layers, num_heads, agg_first):
    E = w_layout["gcn_w"][2]
    d = E // num_heads
    f32 = jnp.float32
    bf16 = jnp.bfloat16

    def kernel(adj_ref, x_ref, w_ref, b_ref, out_ref):
        def W(name):                                    # static slab slice -> bf16 weight
            off, rows, cols = w_layout[name]
            return w_ref[off:off + rows, 0:cols]

        def B(name):                                    # static slab slice -> f32 (1, cols) bias
            row, cols = b_layout[name]
            return b_ref[row:row + 1, 0:cols]

        adj = adj_ref[...]                              # bf16 (N, N)
        x = x_ref[...]                                  # bf16 (N, in_feats)
        gcn_w = W("gcn_w")

        # ---- GCN: h = A_hat @ X @ W + b (association chosen at trace time) ----
        if agg_first:
            ax = jnp.dot(adj, x, preferred_element_type=f32).astype(bf16)
            h = jnp.dot(ax, gcn_w, preferred_element_type=f32)
        else:
            xw = jnp.dot(x, gcn_w, preferred_element_type=f32).astype(bf16)
            h = jnp.dot(adj, xw, preferred_element_type=f32)
        h = h + B("gcn_b")

        # ---- Transformer encoder layers ----
        for l in range(num_layers):
            # Fused QKV projection: one (N,E) x (E,3E) matmul.
            qkv = (jnp.dot(h.astype(bf16), W(f"wqkv{l}"),
                           preferred_element_type=f32) + B(f"bqkv{l}"))
            qkv_b = qkv.astype(bf16)

            # Stack heads on a leading batch dim -> two batched MXU contractions
            # instead of 3*H tiny per-head matmuls.
            q = jnp.stack([qkv_b[:, hh * d:(hh + 1) * d]
                           for hh in range(num_heads)], axis=0)          # (H, N, d)
            k = jnp.stack([qkv_b[:, E + hh * d:E + (hh + 1) * d]
                           for hh in range(num_heads)], axis=0)          # (H, N, d)
            v = jnp.stack([qkv_b[:, 2 * E + hh * d:2 * E + (hh + 1) * d]
                           for hh in range(num_heads)], axis=0)          # (H, N, d)

            # 1/sqrt(d) is folded into the Q weights/bias host-side.
            s = jnp.einsum('hqd,hkd->hqk', q, k, preferred_element_type=f32)
            s = s - jnp.max(s, axis=-1, keepdims=True)
            p = jnp.exp(s)
            p = p * pl.reciprocal(jnp.sum(p, axis=-1, keepdims=True), approx=True)
            o = jnp.einsum('hqk,hkd->hqd', p.astype(bf16), v,
                           preferred_element_type=f32)                   # (H, N, d)

            # All heads live in a single 128-lane group -> cheap lane concat,
            # then ONE (N,E)x(E,E) output projection (K=E, not K=d).
            attn = jnp.concatenate([o[hh] for hh in range(num_heads)], axis=-1)
            # x = attn + dropout(attn) == 2*attn in eval; x2 folded into wout/bout.
            h = (jnp.dot(attn.astype(bf16), W(f"wout{l}"),
                         preferred_element_type=f32) + B(f"bout{l}"))

            ff1 = (jnp.dot(h.astype(bf16), W(f"wff1{l}"),
                           preferred_element_type=f32) + B(f"bff1{l}"))
            ff1 = jnp.maximum(ff1, 0.0)
            # x = ff + dropout(ff) == 2*ff in eval; x2 folded into wff2/bff2.
            h = (jnp.dot(ff1.astype(bf16), W(f"wff2{l}"),
                         preferred_element_type=f32) + B(f"bff2{l}"))

        # ---- final fc into a lane-dense (128-padded) output ----
        out_ref[...] = (jnp.dot(h.astype(bf16), W("fc_w"),
                                preferred_element_type=f32) + B("fc_b"))

    return kernel


def graph_transformer_forward(adj_norm, node_features, params):
    num_layers = len(params["layers"])
    H = params["num_heads"]
    N, in_feats = node_features.shape
    E = params["gcn_w"].shape[1]
    d = E // H
    ff = params["layers"][0]["ff1_w"].shape[0]
    O = params["fc_w"].shape[0]
    O_pad = _ceil_to(O, 128)
    lane_w = _ceil_to(max(E, 3 * E, ff, O_pad), 128)
    scale = 1.0 / (d ** 0.5)

    f32 = jnp.float32
    bf16 = jnp.bfloat16

    # ---- host-side weight prep: transpose, scale-fold, dropout-fold, pack ----
    weights = [("gcn_w", params["gcn_w"])]
    biases = [("gcn_b", params["gcn_b"])]
    for l, lp in enumerate(params["layers"]):
        wqkv = lp["in_proj_w"].T                      # (E, 3E)
        bqkv = lp["in_proj_b"]                        # (3E,)
        wqkv = wqkv.at[:, :E].multiply(scale)         # fold 1/sqrt(d) into Q proj
        bqkv = bqkv.at[:E].multiply(scale)
        weights += [
            (f"wqkv{l}", wqkv),
            (f"wout{l}", 2.0 * lp["out_proj_w"].T),   # eval dropout: x + dropout(x) = 2x
            (f"wff1{l}", lp["ff1_w"].T),
            (f"wff2{l}", 2.0 * lp["ff2_w"].T),
        ]
        biases += [
            (f"bqkv{l}", bqkv),
            (f"bout{l}", 2.0 * lp["out_proj_b"]),
            (f"bff1{l}", lp["ff1_b"]),
            (f"bff2{l}", 2.0 * lp["ff2_b"]),
        ]
    fc_w_pad = jnp.zeros((E, O_pad), f32).at[:, :O].set(params["fc_w"].T.astype(f32))
    fc_b_pad = jnp.zeros((O_pad,), f32).at[:O].set(params["fc_b"].astype(f32))
    weights.append(("fc_w", fc_w_pad))
    biases.append(("fc_b", fc_b_pad))

    w_slab, w_layout = _pack_weight_slab(weights, lane_w, bf16)
    b_slab, b_layout = _pack_bias_slab(biases, lane_w)

    agg_first = E >= in_feats     # contract the narrower width against A_hat
    kernel = _make_kernel(w_layout, b_layout, num_layers, H, agg_first)

    out = pl.pallas_call(
        kernel,
        out_shape=jax.ShapeDtypeStruct((N, O_pad), jnp.float32),
        in_specs=[pl.BlockSpec(memory_space=pltpu.MemorySpace.VMEM)] * 4,
        out_specs=pl.BlockSpec(memory_space=pltpu.MemorySpace.VMEM),
        compiler_params=pltpu.CompilerParams(vmem_limit_bytes=32 * 1024 * 1024),
    )(adj_norm.astype(bf16), node_features.astype(bf16), w_slab, b_slab)

    # PyTorch output keeps the unsqueezed dim: (N, 1, transformer_out_feats)
    return out[:, :O][:, None, :]


def reference_forward(adj_norm, x, params):
    """Pure-JAX f32 mirror of the PyTorch eval-mode forward, for verification."""
    num_heads = params["num_heads"]
    h = adj_norm @ x @ params["gcn_w"] + params["gcn_b"]
    E = h.shape[-1]
    d = E // num_heads
    for lp in params["layers"]:
        q = h @ lp["in_proj_w"][0 * E:1 * E].T + lp["in_proj_b"][0 * E:1 * E]
        k = h @ lp["in_proj_w"][1 * E:2 * E].T + lp["in_proj_b"][1 * E:2 * E]
        v = h @ lp["in_proj_w"][2 * E:3 * E].T + lp["in_proj_b"][2 * E:3 * E]
        heads = []
        for hh in range(num_heads):
            qh, kh, vh = (t[:, hh * d:(hh + 1) * d] for t in (q, k, v))
            s = (qh @ kh.T) / jnp.sqrt(d)
            p = jax.nn.softmax(s, axis=-1)
            heads.append(p @ vh)
        attn = jnp.concatenate(heads, axis=-1) @ lp["out_proj_w"].T + lp["out_proj_b"]
        h = attn + attn                       # x + dropout(x), eval mode
        ff = jnp.maximum(h @ lp["ff1_w"].T + lp["ff1_b"], 0.0) @ lp["ff2_w"].T + lp["ff2_b"]
        h = ff + ff                           # x + dropout(x), eval mode
    out = h @ params["fc_w"].T + params["fc_b"]
    return out[:, None, :]


def init_params(key, in_feats, gcn_out, out_feats, num_heads, ff_dim, num_layers):
    ks = iter(jax.random.split(key, 64))
    s = 0.05
    rnd = lambda shape: (s * jax.random.normal(next(ks), shape)).astype(jnp.float32)
    params = {
        "num_heads": num_heads,
        "gcn_w": rnd((in_feats, gcn_out)),
        "gcn_b": rnd((gcn_out,)),
        "fc_w": rnd((out_feats, gcn_out)),
        "fc_b": rnd((out_feats,)),
        "layers": [],
    }
    for _ in range(num_layers):
        params["layers"].append({
            "in_proj_w": rnd((3 * gcn_out, gcn_out)),
            "in_proj_b": rnd((3 * gcn_out,)),
            "out_proj_w": rnd((gcn_out, gcn_out)),
            "out_proj_b": rnd((gcn_out,)),
            "ff1_w": rnd((ff_dim, gcn_out)),
            "ff1_b": rnd((ff_dim,)),
            "ff2_w": rnd((gcn_out, ff_dim)),
            "ff2_b": rnd((gcn_out,)),
        })
    return params


if __name__ == "__main__":
    key = jax.random.PRNGKey(0)
    N, in_feats, gcn_out, out_feats = 8, 16, 32, 16
    num_heads, ff_dim, num_layers = 4, 128, 2

    k_adj, k_x, k_p = jax.random.split(key, 3)

    # Synthetic graph: random symmetric adjacency + self loops, 'both' normalization.
    a = (jax.random.uniform(k_adj, (N, N)) > 0.5).astype(jnp.float32)
    a = jnp.maximum(a, a.T)
    a = jnp.maximum(a, jnp.eye(N, dtype=jnp.float32))     # avoid zero in-degree
    deg = jnp.sum(a, axis=1)
    dinv = 1.0 / jnp.sqrt(deg)
    adj_norm = (dinv[:, None] * a * dinv[None, :]).astype(jnp.float32)

    node_features = jax.random.normal(k_x, (N, in_feats), dtype=jnp.float32)
    params = init_params(k_p, in_feats, gcn_out, out_feats, num_heads, ff_dim, num_layers)

    out = graph_transformer_forward(adj_norm, node_features, params)
    out = jax.block_until_ready(out)

    ref = reference_forward(adj_norm, node_features, params)
    assert out.shape == (N, 1, out_feats)
    assert jnp.all(jnp.isfinite(out))
    # bf16 matmul inputs (f32 accumulation) -> slightly looser tolerance vs f32 ref.
    assert jnp.allclose(out, ref, rtol=2e-2, atol=2e-2)

    print("KERNEL_OK")
</pallas_src>

<mosaic_0001>
module attributes {stable_mosaic.version = 11 : i64} {
  func.func @kernel(%arg0: memref<8x8xbf16, #tpu.memory_space<vmem>>, %arg1: memref<8x16xbf16, #tpu.memory_space<vmem>>, %arg2: memref<496x128xbf16, #tpu.memory_space<vmem>>, %arg3: memref<16x128xf32, #tpu.memory_space<vmem>>, %arg4: memref<8x128xf32, #tpu.memory_space<vmem>>) attributes {dimension_semantics = [], scalar_prefetch = 0 : i64, scratch_operands = 0 : i64, tpu.core_type = #tpu.core_type<tc>} {
    %c0 = arith.constant 0 : index
    %c0_0 = arith.constant 0 : index
    %0 = vector.load %arg0[%c0, %c0_0] : memref<8x8xbf16, #tpu.memory_space<vmem>>, vector<8x8xbf16>
    %c0_1 = arith.constant 0 : index
    %c0_2 = arith.constant 0 : index
    %1 = vector.load %arg1[%c0_1, %c0_2] : memref<8x16xbf16, #tpu.memory_space<vmem>>, vector<8x16xbf16>
    %c0_3 = arith.constant 0 : index
    %c0_4 = arith.constant 0 : index
    %2 = vector.load %arg2[%c0_3, %c0_4] : memref<496x128xbf16, #tpu.memory_space<vmem>>, vector<16x32xbf16>
    %cst = arith.constant dense<0.000000e+00> : vector<8x16xf32>
    %3 = tpu.matmul %0, %1, %cst {dimension_numbers = #tpu.dot_dimension_numbers<[1], [0], [0], [1], [0, 0, 1, 1], [], []>} : vector<8x8xbf16>, vector<8x16xbf16>, vector<8x16xf32> -> vector<8x16xf32>
    %4 = arith.truncf %3 : vector<8x16xf32> to vector<8x16xbf16>
    %cst_5 = arith.constant dense<0.000000e+00> : vector<8x32xf32>
    %5 = tpu.matmul %4, %2, %cst_5 {dimension_numbers = #tpu.dot_dimension_numbers<[1], [0], [0], [1], [0, 0, 1, 1], [], []>} : vector<8x16xbf16>, vector<16x32xbf16>, vector<8x32xf32> -> vector<8x32xf32>
    %c0_6 = arith.constant 0 : index
    %c0_7 = arith.constant 0 : index
    %6 = vector.load %arg3[%c0_6, %c0_7] : memref<16x128xf32, #tpu.memory_space<vmem>>, vector<1x32xf32>
    %7 = vector.broadcast %6 : vector<1x32xf32> to vector<8x32xf32>
    %8 = arith.addf %5, %7 : vector<8x32xf32>
    %9 = arith.truncf %8 : vector<8x32xf32> to vector<8x32xbf16>
    %c16 = arith.constant 16 : index
    %c0_8 = arith.constant 0 : index
    %10 = vector.load %arg2[%c16, %c0_8] : memref<496x128xbf16, #tpu.memory_space<vmem>>, vector<32x96xbf16>
    %cst_9 = arith.constant dense<0.000000e+00> : vector<8x96xf32>
    %11 = tpu.matmul %9, %10, %cst_9 {dimension_numbers = #tpu.dot_dimension_numbers<[1], [0], [0], [1], [0, 0, 1, 1], [], []>} : vector<8x32xbf16>, vector<32x96xbf16>, vector<8x96xf32> -> vector<8x96xf32>
    %c1 = arith.constant 1 : index
    %c0_10 = arith.constant 0 : index
    %12 = vector.load %arg3[%c1, %c0_10] : memref<16x128xf32, #tpu.memory_space<vmem>>, vector<1x96xf32>
    %13 = vector.broadcast %12 : vector<1x96xf32> to vector<8x96xf32>
    %14 = arith.addf %11, %13 : vector<8x96xf32>
    %15 = arith.truncf %14 : vector<8x96xf32> to vector<8x96xbf16>
    %16 = vector.extract_strided_slice %15 {offsets = [0, 0], sizes = [8, 8], strides = [1, 1]} : vector<8x96xbf16> to vector<8x8xbf16>
    %17 = vector.extract_strided_slice %15 {offsets = [0, 8], sizes = [8, 8], strides = [1, 1]} : vector<8x96xbf16> to vector<8x8xbf16>
    %18 = vector.extract_strided_slice %15 {offsets = [0, 16], sizes = [8, 8], strides = [1, 1]} : vector<8x96xbf16> to vector<8x8xbf16>
    %19 = vector.extract_strided_slice %15 {offsets = [0, 24], sizes = [8, 8], strides = [1, 1]} : vector<8x96xbf16> to vector<8x8xbf16>
    %20 = vector.shape_cast %16 : vector<8x8xbf16> to vector<1x8x8xbf16>
    %21 = vector.shape_cast %17 : vector<8x8xbf16> to vector<1x8x8xbf16>
    %22 = vector.shape_cast %18 : vector<8x8xbf16> to vector<1x8x8xbf16>
    %23 = vector.shape_cast %19 : vector<8x8xbf16> to vector<1x8x8xbf16>
    %24 = tpu.concatenate %20, %21, %22, %23 in 0 : vector<1x8x8xbf16>, vector<1x8x8xbf16>, vector<1x8x8xbf16>, vector<1x8x8xbf16> -> vector<4x8x8xbf16>
    %25 = vector.extract_strided_slice %15 {offsets = [0, 32], sizes = [8, 8], strides = [1, 1]} : vector<8x96xbf16> to vector<8x8xbf16>
    %26 = vector.extract_strided_slice %15 {offsets = [0, 40], sizes = [8, 8], strides = [1, 1]} : vector<8x96xbf16> to vector<8x8xbf16>
    %27 = vector.extract_strided_slice %15 {offsets = [0, 48], sizes = [8, 8], strides = [1, 1]} : vector<8x96xbf16> to vector<8x8xbf16>
    %28 = vector.extract_strided_slice %15 {offsets = [0, 56], sizes = [8, 8], strides = [1, 1]} : vector<8x96xbf16> to vector<8x8xbf16>
    %29 = vector.shape_cast %25 : vector<8x8xbf16> to vector<1x8x8xbf16>
    %30 = vector.shape_cast %26 : vector<8x8xbf16> to vector<1x8x8xbf16>
    %31 = vector.shape_cast %27 : vector<8x8xbf16> to vector<1x8x8xbf16>
    %32 = vector.shape_cast %28 : vector<8x8xbf16> to vector<1x8x8xbf16>
    %33 = tpu.concatenate %29, %30, %31, %32 in 0 : vector<1x8x8xbf16>, vector<1x8x8xbf16>, vector<1x8x8xbf16>, vector<1x8x8xbf16> -> vector<4x8x8xbf16>
    %34 = vector.extract_strided_slice %15 {offsets = [0, 64], sizes = [8, 8], strides = [1, 1]} : vector<8x96xbf16> to vector<8x8xbf16>
    %35 = vector.extract_strided_slice %15 {offsets = [0, 72], sizes = [8, 8], strides = [1, 1]} : vector<8x96xbf16> to vector<8x8xbf16>
    %36 = vector.extract_strided_slice %15 {offsets = [0, 80], sizes = [8, 8], strides = [1, 1]} : vector<8x96xbf16> to vector<8x8xbf16>
    %37 = vector.extract_strided_slice %15 {offsets = [0, 88], sizes = [8, 8], strides = [1, 1]} : vector<8x96xbf16> to vector<8x8xbf16>
    %38 = vector.shape_cast %34 : vector<8x8xbf16> to vector<1x8x8xbf16>
    %39 = vector.shape_cast %35 : vector<8x8xbf16> to vector<1x8x8xbf16>
    %40 = vector.shape_cast %36 : vector<8x8xbf16> to vector<1x8x8xbf16>
    %41 = vector.shape_cast %37 : vector<8x8xbf16> to vector<1x8x8xbf16>
    %42 = tpu.concatenate %38, %39, %40, %41 in 0 : vector<1x8x8xbf16>, vector<1x8x8xbf16>, vector<1x8x8xbf16>, vector<1x8x8xbf16> -> vector<4x8x8xbf16>
    "tpu.trace_start"() <{level = 10 : i32, message = "hqd,hkd->hqk"}> : () -> ()
    %cst_11 = arith.constant dense<0.000000e+00> : vector<4x8x8xf32>
    %43 = tpu.matmul %24, %33, %cst_11 {dimension_numbers = #tpu.dot_dimension_numbers<[2], [2], [1], [1], [0, 0, 0, 1, 1, 1], [0], [0]>} : vector<4x8x8xbf16>, vector<4x8x8xbf16>, vector<4x8x8xf32> -> vector<4x8x8xf32>
    "tpu.trace_stop"() : () -> ()
    %cst_12 = arith.constant dense<0xFF800000> : vector<4x8xf32>
    %44 = vector.multi_reduction <maximumf>, %43, %cst_12 [2] : vector<4x8x8xf32> to vector<4x8xf32>
    %45 = vector.shape_cast %44 : vector<4x8xf32> to vector<4x8x1xf32>
    %46 = vector.broadcast %45 : vector<4x8x1xf32> to vector<4x8x8xf32>
    %47 = arith.subf %43, %46 : vector<4x8x8xf32>
    %48 = math.exp %47 : vector<4x8x8xf32>
    %cst_13 = arith.constant dense<0.000000e+00> : vector<4x8xf32>
    %49 = vector.multi_reduction <add>, %48, %cst_13 [2] : vector<4x8x8xf32> to vector<4x8xf32>
    %50 = vector.shape_cast %49 : vector<4x8xf32> to vector<4x8x1xf32>
    %51 = tpu.reciprocal %50 {approx = true} : vector<4x8x1xf32> -> vector<4x8x1xf32>
    %52 = vector.broadcast %51 : vector<4x8x1xf32> to vector<4x8x8xf32>
    %53 = arith.mulf %48, %52 : vector<4x8x8xf32>
    %54 = arith.truncf %53 : vector<4x8x8xf32> to vector<4x8x8xbf16>
    "tpu.trace_start"() <{level = 10 : i32, message = "hqk,hkd->hqd"}> : () -> ()
    %cst_14 = arith.constant dense<0.000000e+00> : vector<4x8x8xf32>
    %55 = tpu.matmul %54, %42, %cst_14 {dimension_numbers = #tpu.dot_dimension_numbers<[2], [1], [1], [2], [0, 0, 0, 1, 1, 2], [0], [0]>} : vector<4x8x8xbf16>, vector<4x8x8xbf16>, vector<4x8x8xf32> -> vector<4x8x8xf32>
    "tpu.trace_stop"() : () -> ()
    %56 = vector.extract_strided_slice %55 {offsets = [0, 0, 0], sizes = [1, 8, 8], strides = [1, 1, 1]} : vector<4x8x8xf32> to vector<1x8x8xf32>
    %57 = vector.shape_cast %56 : vector<1x8x8xf32> to vector<8x8xf32>
    %58 = vector.extract_strided_slice %55 {offsets = [1, 0, 0], sizes = [1, 8, 8], strides = [1, 1, 1]} : vector<4x8x8xf32> to vector<1x8x8xf32>
    %59 = vector.shape_cast %58 : vector<1x8x8xf32> to vector<8x8xf32>
    %60 = vector.extract_strided_slice %55 {offsets = [2, 0, 0], sizes = [1, 8, 8], strides = [1, 1, 1]} : vector<4x8x8xf32> to vector<1x8x8xf32>
    %61 = vector.shape_cast %60 : vector<1x8x8xf32> to vector<8x8xf32>
    %62 = vector.extract_strided_slice %55 {offsets = [3, 0, 0], sizes = [1, 8, 8], strides = [1, 1, 1]} : vector<4x8x8xf32> to vector<1x8x8xf32>
    %63 = vector.shape_cast %62 : vector<1x8x8xf32> to vector<8x8xf32>
    %64 = tpu.concatenate %57, %59, %61, %63 in 1 : vector<8x8xf32>, vector<8x8xf32>, vector<8x8xf32>, vector<8x8xf32> -> vector<8x32xf32>
    %65 = arith.truncf %64 : vector<8x32xf32> to vector<8x32xbf16>
    %c48 = arith.constant 48 : index
    %c0_15 = arith.constant 0 : index
    %66 = vector.load %arg2[%c48, %c0_15] : memref<496x128xbf16, #tpu.memory_space<vmem>>, vector<32x32xbf16>
    %cst_16 = arith.constant dense<0.000000e+00> : vector<8x32xf32>
    %67 = tpu.matmul %65, %66, %cst_16 {dimension_numbers = #tpu.dot_dimension_numbers<[1], [0], [0], [1], [0, 0, 1, 1], [], []>} : vector<8x32xbf16>, vector<32x32xbf16>, vector<8x32xf32> -> vector<8x32xf32>
    %c2 = arith.constant 2 : index
    %c0_17 = arith.constant 0 : index
    %68 = vector.load %arg3[%c2, %c0_17] : memref<16x128xf32, #tpu.memory_space<vmem>>, vector<1x32xf32>
    %69 = vector.broadcast %68 : vector<1x32xf32> to vector<8x32xf32>
    %70 = arith.addf %67, %69 : vector<8x32xf32>
    %71 = arith.truncf %70 : vector<8x32xf32> to vector<8x32xbf16>
    %c80 = arith.constant 80 : index
    %c0_18 = arith.constant 0 : index
    %72 = vector.load %arg2[%c80, %c0_18] : memref<496x128xbf16, #tpu.memory_space<vmem>>, vector<32x128xbf16>
    %cst_19 = arith.constant dense<0.000000e+00> : vector<8x128xf32>
    %73 = tpu.matmul %71, %72, %cst_19 {dimension_numbers = #tpu.dot_dimension_numbers<[1], [0], [0], [1], [0, 0, 1, 1], [], []>} : vector<8x32xbf16>, vector<32x128xbf16>, vector<8x128xf32> -> vector<8x128xf32>
    %c3 = arith.constant 3 : index
    %c0_20 = arith.constant 0 : index
    %74 = vector.load %arg3[%c3, %c0_20] : memref<16x128xf32, #tpu.memory_space<vmem>>, vector<1x128xf32>
    %75 = vector.broadcast %74 : vector<1x128xf32> to vector<8x128xf32>
    %76 = arith.addf %73, %75 : vector<8x128xf32>
    %cst_21 = arith.constant 0.000000e+00 : f32
    %77 = vector.broadcast %cst_21 : f32 to vector<8x128xf32>
    %78 = arith.maximumf %76, %77 : vector<8x128xf32>
    %79 = arith.truncf %78 : vector<8x128xf32> to vector<8x128xbf16>
    %c112 = arith.constant 112 : index
    %c0_22 = arith.constant 0 : index
    %80 = vector.load %arg2[%c112, %c0_22] : memref<496x128xbf16, #tpu.memory_space<vmem>>, vector<128x32xbf16>
    %cst_23 = arith.constant dense<0.000000e+00> : vector<8x32xf32>
    %81 = tpu.matmul %79, %80, %cst_23 {dimension_numbers = #tpu.dot_dimension_numbers<[1], [0], [0], [1], [0, 0, 1, 1], [], []>} : vector<8x128xbf16>, vector<128x32xbf16>, vector<8x32xf32> -> vector<8x32xf32>
    %c4 = arith.constant 4 : index
    %c0_24 = arith.constant 0 : index
    %82 = vector.load %arg3[%c4, %c0_24] : memref<16x128xf32, #tpu.memory_space<vmem>>, vector<1x32xf32>
    %83 = vector.broadcast %82 : vector<1x32xf32> to vector<8x32xf32>
    %84 = arith.addf %81, %83 : vector<8x32xf32>
    %85 = arith.truncf %84 : vector<8x32xf32> to vector<8x32xbf16>
    %c240 = arith.constant 240 : index
    %c0_25 = arith.constant 0 : index
    %86 = vector.load %arg2[%c240, %c0_25] : memref<496x128xbf16, #tpu.memory_space<vmem>>, vector<32x96xbf16>
    %cst_26 = arith.constant dense<0.000000e+00> : vector<8x96xf32>
    %87 = tpu.matmul %85, %86, %cst_26 {dimension_numbers = #tpu.dot_dimension_numbers<[1], [0], [0], [1], [0, 0, 1, 1], [], []>} : vector<8x32xbf16>, vector<32x96xbf16>, vector<8x96xf32> -> vector<8x96xf32>
    %c5 = arith.constant 5 : index
    %c0_27 = arith.constant 0 : index
    %88 = vector.load %arg3[%c5, %c0_27] : memref<16x128xf32, #tpu.memory_space<vmem>>, vector<1x96xf32>
    %89 = vector.broadcast %88 : vector<1x96xf32> to vector<8x96xf32>
    %90 = arith.addf %87, %89 : vector<8x96xf32>
    %91 = arith.truncf %90 : vector<8x96xf32> to vector<8x96xbf16>
    %92 = vector.extract_strided_slice %91 {offsets = [0, 0], sizes = [8, 8], strides = [1, 1]} : vector<8x96xbf16> to vector<8x8xbf16>
    %93 = vector.extract_strided_slice %91 {offsets = [0, 8], sizes = [8, 8], strides = [1, 1]} : vector<8x96xbf16> to vector<8x8xbf16>
    %94 = vector.extract_strided_slice %91 {offsets = [0, 16], sizes = [8, 8], strides = [1, 1]} : vector<8x96xbf16> to vector<8x8xbf16>
    %95 = vector.extract_strided_slice %91 {offsets = [0, 24], sizes = [8, 8], strides = [1, 1]} : vector<8x96xbf16> to vector<8x8xbf16>
    %96 = vector.shape_cast %92 : vector<8x8xbf16> to vector<1x8x8xbf16>
    %97 = vector.shape_cast %93 : vector<8x8xbf16> to vector<1x8x8xbf16>
    %98 = vector.shape_cast %94 : vector<8x8xbf16> to vector<1x8x8xbf16>
    %99 = vector.shape_cast %95 : vector<8x8xbf16> to vector<1x8x8xbf16>
    %100 = tpu.concatenate %96, %97, %98, %99 in 0 : vector<1x8x8xbf16>, vector<1x8x8xbf16>, vector<1x8x8xbf16>, vector<1x8x8xbf16> -> vector<4x8x8xbf16>
    %101 = vector.extract_strided_slice %91 {offsets = [0, 32], sizes = [8, 8], strides = [1, 1]} : vector<8x96xbf16> to vector<8x8xbf16>
    %102 = vector.extract_strided_slice %91 {offsets = [0, 40], sizes = [8, 8], strides = [1, 1]} : vector<8x96xbf16> to vector<8x8xbf16>
    %103 = vector.extract_strided_slice %91 {offsets = [0, 48], sizes = [8, 8], strides = [1, 1]} : vector<8x96xbf16> to vector<8x8xbf16>
    %104 = vector.extract_strided_slice %91 {offsets = [0, 56], sizes = [8, 8], strides = [1, 1]} : vector<8x96xbf16> to vector<8x8xbf16>
    %105 = vector.shape_cast %101 : vector<8x8xbf16> to vector<1x8x8xbf16>
    %106 = vector.shape_cast %102 : vector<8x8xbf16> to vector<1x8x8xbf16>
    %107 = vector.shape_cast %103 : vector<8x8xbf16> to vector<1x8x8xbf16>
    %108 = vector.shape_cast %104 : vector<8x8xbf16> to vector<1x8x8xbf16>
    %109 = tpu.concatenate %105, %106, %107, %108 in 0 : vector<1x8x8xbf16>, vector<1x8x8xbf16>, vector<1x8x8xbf16>, vector<1x8x8xbf16> -> vector<4x8x8xbf16>
    %110 = vector.extract_strided_slice %91 {offsets = [0, 64], sizes = [8, 8], strides = [1, 1]} : vector<8x96xbf16> to vector<8x8xbf16>
    %111 = vector.extract_strided_slice %91 {offsets = [0, 72], sizes = [8, 8], strides = [1, 1]} : vector<8x96xbf16> to vector<8x8xbf16>
    %112 = vector.extract_strided_slice %91 {offsets = [0, 80], sizes = [8, 8], strides = [1, 1]} : vector<8x96xbf16> to vector<8x8xbf16>
    %113 = vector.extract_strided_slice %91 {offsets = [0, 88], sizes = [8, 8], strides = [1, 1]} : vector<8x96xbf16> to vector<8x8xbf16>
    %114 = vector.shape_cast %110 : vector<8x8xbf16> to vector<1x8x8xbf16>
    %115 = vector.shape_cast %111 : vector<8x8xbf16> to vector<1x8x8xbf16>
    %116 = vector.shape_cast %112 : vector<8x8xbf16> to vector<1x8x8xbf16>
    %117 = vector.shape_cast %113 : vector<8x8xbf16> to vector<1x8x8xbf16>
    %118 = tpu.concatenate %114, %115, %116, %117 in 0 : vector<1x8x8xbf16>, vector<1x8x8xbf16>, vector<1x8x8xbf16>, vector<1x8x8xbf16> -> vector<4x8x8xbf16>
    "tpu.trace_start"() <{level = 10 : i32, message = "hqd,hkd->hqk"}> : () -> ()
    %cst_28 = arith.constant dense<0.000000e+00> : vector<4x8x8xf32>
    %119 = tpu.matmul %100, %109, %cst_28 {dimension_numbers = #tpu.dot_dimension_numbers<[2], [2], [1], [1], [0, 0, 0, 1, 1, 1], [0], [0]>} : vector<4x8x8xbf16>, vector<4x8x8xbf16>, vector<4x8x8xf32> -> vector<4x8x8xf32>
    "tpu.trace_stop"() : () -> ()
    %cst_29 = arith.constant dense<0xFF800000> : vector<4x8xf32>
    %120 = vector.multi_reduction <maximumf>, %119, %cst_29 [2] : vector<4x8x8xf32> to vector<4x8xf32>
    %121 = vector.shape_cast %120 : vector<4x8xf32> to vector<4x8x1xf32>
    %122 = vector.broadcast %121 : vector<4x8x1xf32> to vector<4x8x8xf32>
    %123 = arith.subf %119, %122 : vector<4x8x8xf32>
    %124 = math.exp %123 : vector<4x8x8xf32>
    %cst_30 = arith.constant dense<0.000000e+00> : vector<4x8xf32>
    %125 = vector.multi_reduction <add>, %124, %cst_30 [2] : vector<4x8x8xf32> to vector<4x8xf32>
    %126 = vector.shape_cast %125 : vector<4x8xf32> to vector<4x8x1xf32>
    %127 = tpu.reciprocal %126 {approx = true} : vector<4x8x1xf32> -> vector<4x8x1xf32>
    %128 = vector.broadcast %127 : vector<4x8x1xf32> to vector<4x8x8xf32>
    %129 = arith.mulf %124, %128 : vector<4x8x8xf32>
    %130 = arith.truncf %129 : vector<4x8x8xf32> to vector<4x8x8xbf16>
    "tpu.trace_start"() <{level = 10 : i32, message = "hqk,hkd->hqd"}> : () -> ()
    %cst_31 = arith.constant dense<0.000000e+00> : vector<4x8x8xf32>
    %131 = tpu.matmul %130, %118, %cst_31 {dimension_numbers = #tpu.dot_dimension_numbers<[2], [1], [1], [2], [0, 0, 0, 1, 1, 2], [0], [0]>} : vector<4x8x8xbf16>, vector<4x8x8xbf16>, vector<4x8x8xf32> -> vector<4x8x8xf32>
    "tpu.trace_stop"() : () -> ()
    %132 = vector.extract_strided_slice %131 {offsets = [0, 0, 0], sizes = [1, 8, 8], strides = [1, 1, 1]} : vector<4x8x8xf32> to vector<1x8x8xf32>
    %133 = vector.shape_cast %132 : vector<1x8x8xf32> to vector<8x8xf32>
    %134 = vector.extract_strided_slice %131 {offsets = [1, 0, 0], sizes = [1, 8, 8], strides = [1, 1, 1]} : vector<4x8x8xf32> to vector<1x8x8xf32>
    %135 = vector.shape_cast %134 : vector<1x8x8xf32> to vector<8x8xf32>
    %136 = vector.extract_strided_slice %131 {offsets = [2, 0, 0], sizes = [1, 8, 8], strides = [1, 1, 1]} : vector<4x8x8xf32> to vector<1x8x8xf32>
    %137 = vector.shape_cast %136 : vector<1x8x8xf32> to vector<8x8xf32>
    %138 = vector.extract_strided_slice %131 {offsets = [3, 0, 0], sizes = [1, 8, 8], strides = [1, 1, 1]} : vector<4x8x8xf32> to vector<1x8x8xf32>
    %139 = vector.shape_cast %138 : vector<1x8x8xf32> to vector<8x8xf32>
    %140 = tpu.concatenate %133, %135, %137, %139 in 1 : vector<8x8xf32>, vector<8x8xf32>, vector<8x8xf32>, vector<8x8xf32> -> vector<8x32xf32>
    %141 = arith.truncf %140 : vector<8x32xf32> to vector<8x32xbf16>
    %c272 = arith.constant 272 : index
    %c0_32 = arith.constant 0 : index
    %142 = vector.load %arg2[%c272, %c0_32] : memref<496x128xbf16, #tpu.memory_space<vmem>>, vector<32x32xbf16>
    %cst_33 = arith.constant dense<0.000000e+00> : vector<8x32xf32>
    %143 = tpu.matmul %141, %142, %cst_33 {dimension_numbers = #tpu.dot_dimension_numbers<[1], [0], [0], [1], [0, 0, 1, 1], [], []>} : vector<8x32xbf16>, vector<32x32xbf16>, vector<8x32xf32> -> vector<8x32xf32>
    %c6 = arith.constant 6 : index
    %c0_34 = arith.constant 0 : index
    %144 = vector.load %arg3[%c6, %c0_34] : memref<16x128xf32, #tpu.memory_space<vmem>>, vector<1x32xf32>
    %145 = vector.broadcast %144 : vector<1x32xf32> to vector<8x32xf32>
    %146 = arith.addf %143, %145 : vector<8x32xf32>
    %147 = arith.truncf %146 : vector<8x32xf32> to vector<8x32xbf16>
    %c304 = arith.constant 304 : index
    %c0_35 = arith.constant 0 : index
    %148 = vector.load %arg2[%c304, %c0_35] : memref<496x128xbf16, #tpu.memory_space<vmem>>, vector<32x128xbf16>
    %cst_36 = arith.constant dense<0.000000e+00> : vector<8x128xf32>
    %149 = tpu.matmul %147, %148, %cst_36 {dimension_numbers = #tpu.dot_dimension_numbers<[1], [0], [0], [1], [0, 0, 1, 1], [], []>} : vector<8x32xbf16>, vector<32x128xbf16>, vector<8x128xf32> -> vector<8x128xf32>
    %c7 = arith.constant 7 : index
    %c0_37 = arith.constant 0 : index
    %150 = vector.load %arg3[%c7, %c0_37] : memref<16x128xf32, #tpu.memory_space<vmem>>, vector<1x128xf32>
    %151 = vector.broadcast %150 : vector<1x128xf32> to vector<8x128xf32>
    %152 = arith.addf %149, %151 : vector<8x128xf32>
    %cst_38 = arith.constant 0.000000e+00 : f32
    %153 = vector.broadcast %cst_38 : f32 to vector<8x128xf32>
    %154 = arith.maximumf %152, %153 : vector<8x128xf32>
    %155 = arith.truncf %154 : vector<8x128xf32> to vector<8x128xbf16>
    %c336 = arith.constant 336 : index
    %c0_39 = arith.constant 0 : index
    %156 = vector.load %arg2[%c336, %c0_39] : memref<496x128xbf16, #tpu.memory_space<vmem>>, vector<128x32xbf16>
    %cst_40 = arith.constant dense<0.000000e+00> : vector<8x32xf32>
    %157 = tpu.matmul %155, %156, %cst_40 {dimension_numbers = #tpu.dot_dimension_numbers<[1], [0], [0], [1], [0, 0, 1, 1], [], []>} : vector<8x128xbf16>, vector<128x32xbf16>, vector<8x32xf32> -> vector<8x32xf32>
    %c8 = arith.constant 8 : index
    %c0_41 = arith.constant 0 : index
    %158 = vector.load %arg3[%c8, %c0_41] : memref<16x128xf32, #tpu.memory_space<vmem>>, vector<1x32xf32>
    %159 = vector.broadcast %158 : vector<1x32xf32> to vector<8x32xf32>
    %160 = arith.addf %157, %159 : vector<8x32xf32>
    %161 = arith.truncf %160 : vector<8x32xf32> to vector<8x32xbf16>
    %c464 = arith.constant 464 : index
    %c0_42 = arith.constant 0 : index
    %162 = vector.load %arg2[%c464, %c0_42] : memref<496x128xbf16, #tpu.memory_space<vmem>>, vector<32x128xbf16>
    %cst_43 = arith.constant dense<0.000000e+00> : vector<8x128xf32>
    %163 = tpu.matmul %161, %162, %cst_43 {dimension_numbers = #tpu.dot_dimension_numbers<[1], [0], [0], [1], [0, 0, 1, 1], [], []>} : vector<8x32xbf16>, vector<32x128xbf16>, vector<8x128xf32> -> vector<8x128xf32>
    %c9 = arith.constant 9 : index
    %c0_44 = arith.constant 0 : index
    %164 = vector.load %arg3[%c9, %c0_44] : memref<16x128xf32, #tpu.memory_space<vmem>>, vector<1x128xf32>
    %165 = vector.broadcast %164 : vector<1x128xf32> to vector<8x128xf32>
    %166 = arith.addf %163, %165 : vector<8x128xf32>
    %c0_45 = arith.constant 0 : index
    %c0_46 = arith.constant 0 : index
    %167 = vector.load %arg4[%c0_45, %c0_46] : memref<8x128xf32, #tpu.memory_space<vmem>>, vector<8x128xf32>
    tpu.vector_store %arg4[%c0_45, %c0_46], %166 {strides = array<i32>} : memref<8x128xf32, #tpu.memory_space<vmem>>, vector<8x128xf32>,
    return
  }
}

</mosaic_0001>

<llo_original>
// kernel: tpu_custom_call.1
$region0: #{tpu_custom_call.1}
  #allocation0 [shape = 'u32[]', space=smem, size = 0x4, offset = 0x4, fixed_abs, tag = 'smem constant byte address 0x4 - core index']
  #allocation1 [shape = 'u32[144,128]{1,0:T(1,128)}', space=vmem, size = 0x12000, scoped, tag = 'internal scratch']
  %s0 = inlined_call_operand.hbm [shape: bf16[8,8], index: 0, kind: input, shape index: {}]
  %s1 = inlined_call_operand.hbm [shape: bf16[8,16], index: 1, kind: input, shape index: {}]
  %s2 = inlined_call_operand.hbm [shape: bf16[496,128], index: 2, kind: input, shape index: {}]
  %s3 = inlined_call_operand.hbm [shape: f32[16,128], index: 3, kind: input, shape index: {}]
  %s4 = inlined_call_operand.hbm [shape: f32[8,128], index: 4, kind: output, shape index: {}]
  %s5 = sld [smem:[#allocation0]]
  $region42: #{tpu_custom_call.1} parent=0
    _
  %s7 = ssub.s32 1, %s5
  %s8 = scalar_select 0, %s7, %s5
  $region1: #{tpu_custom_call.1} parent=0
    #allocation2 [shape = 'u8[2048]{0}', space=vmem, size = 0x800, scoped, tag = 'input window, operand 0, single buffered']
    #allocation3 [shape = 's32[1]{0}', space=sflag, size = 0x4, scoped, tag = 'scoped memory for tpu_custom_call.1']
    #allocation4 [shape = 's32[1]{0}', space=sflag, size = 0x4, scoped, tag = 'scoped memory for tpu_custom_call.1']
    #allocation5 [shape = 'u8[2048]{0}', space=vmem, size = 0x800, scoped, tag = 'input window, operand 1, single buffered']
    #allocation6 [shape = 's32[1]{0}', space=sflag, size = 0x4, scoped, tag = 'scoped memory for tpu_custom_call.1']
    #allocation7 [shape = 'u8[126976]{0}', space=vmem, size = 0x1f000, scoped, tag = 'input window, operand 2, single buffered']
    #allocation8 [shape = 'u8[8192]{0}', space=vmem, size = 0x2000, scoped, tag = 'input window, operand 3, single buffered']
    #allocation9 [shape = 's32[1]{0}', space=sflag, size = 0x4, scoped, tag = 'scoped memory for tpu_custom_call.1']
    #allocation10 [shape = 'u8[4096]{0}', space=vmem, size = 0x1000, scoped, tag = 'output window, operand 0, single buffered']
    %9 = vsyncpa [#allocation3], 0
    %10 = vsyncpa [#allocation6], 0
    %11 = vsyncpa [#allocation9], 0
    %12 = vsyncpa [#allocation4], 0
    // Predicated region
    $region2: #{tpu_custom_call.1} parent=1 // pred_check
      _
    $region3: #{tpu_custom_call.1} parent=1 // pred_check_branch
      %14 = sbr.rel (0) target = $region5
    $region4: #{tpu_custom_call.1} parent=1 // pred_region
      %s16 = ssub.s32 64, 64
      %17 = vsyncadd [#allocation3], %s16
      %s19 = sshll.u32 [#allocation2], 4
      %s20 = int_to_ptr.vmem [resolvable:$true] %s19
      %22 = dma.hbm_to_vmem [thread:$0]  %s0, 64, %s20, [#allocation3]
    $region5: #{tpu_custom_call.1} parent=1 // pred_fallthru
      _
    // Predicated region
    $region6: #{tpu_custom_call.1} parent=1 // pred_check
      _
    $region7: #{tpu_custom_call.1} parent=1 // pred_check_branch
      %24 = sbr.rel (0) target = $region9
    $region8: #{tpu_custom_call.1} parent=1 // pred_region
      %s26 = ssub.s32 64, 64
      %27 = vsyncadd [#allocation6], %s26
      %s29 = sshll.u32 [#allocation5], 4
      %s30 = int_to_ptr.vmem [resolvable:$true] %s29
      %32 = dma.hbm_to_vmem [thread:$0]  %s1, 64, %s30, [#allocation6]
    $region9: #{tpu_custom_call.1} parent=1 // pred_fallthru
      _
    // Predicated region
    $region10: #{tpu_custom_call.1} parent=1 // pred_check
      _
    $region11: #{tpu_custom_call.1} parent=1 // pred_check_branch
      %34 = sbr.rel (0) target = $region13
    $region12: #{tpu_custom_call.1} parent=1 // pred_region
      %s36 = ssub.s32 3968, 3968
      %37 = vsyncadd [#allocation6], %s36
      %s38 = sshll.u32 [#allocation7], 4
      %s39 = int_to_ptr.vmem [resolvable:$true] %s38
      %44 = dma.hbm_to_vmem [thread:$0]  %s2, 3968, %s39, [#allocation6], 64, 64, 4
    $region13: #{tpu_custom_call.1} parent=1 // pred_fallthru
      _
    // Predicated region
    $region14: #{tpu_custom_call.1} parent=1 // pred_check
      _
    $region15: #{tpu_custom_call.1} parent=1 // pred_check_branch
      %46 = sbr.rel (0) target = $region17
    $region16: #{tpu_custom_call.1} parent=1 // pred_region
      %s48 = ssub.s32 256, 256
      %49 = vsyncadd [#allocation9], %s48
      %s50 = sshll.u32 [#allocation8], 4
      %s51 = int_to_ptr.vmem [resolvable:$true] %s50
      %56 = dma.hbm_to_vmem [thread:$0]  %s3, 256, %s51, [#allocation9], 128, 128, 8
    $region17: #{tpu_custom_call.1} parent=1 // pred_fallthru
      _
    // Predicated region
    $region18: #{tpu_custom_call.1} parent=1 // pred_check
      _
    $region19: #{tpu_custom_call.1} parent=1 // pred_check_branch
      %58 = sbr.rel (0) target = $region21
    $region20: #{tpu_custom_call.1} parent=1 // pred_region
      %59 = dma.done [#allocation3], 64
    $region21: #{tpu_custom_call.1} parent=1 // pred_fallthru
      _
    // Predicated region
    $region22: #{tpu_custom_call.1} parent=1 // pred_check
      _
    $region23: #{tpu_custom_call.1} parent=1 // pred_check_branch
      %61 = sbr.rel (0) target = $region25
    $region24: #{tpu_custom_call.1} parent=1 // pred_region
      %62 = dma.done [#allocation6], 64
    $region25: #{tpu_custom_call.1} parent=1 // pred_fallthru
      _
    // Predicated region
    $region26: #{tpu_custom_call.1} parent=1 // pred_check
      _
    $region27: #{tpu_custom_call.1} parent=1 // pred_check_branch
      %64 = sbr.rel (0) target = $region29
    $region28: #{tpu_custom_call.1} parent=1 // pred_region
      %65 = dma.done [#allocation6], 3968
    $region29: #{tpu_custom_call.1} parent=1 // pred_fallthru
      _
    // Predicated region
    $region30: #{tpu_custom_call.1} parent=1 // pred_check
      _
    $region31: #{tpu_custom_call.1} parent=1 // pred_check_branch
      %67 = sbr.rel (0) target = $region33
    $region32: #{tpu_custom_call.1} parent=1 // pred_region
      %68 = dma.done [#allocation9], 256
    $region33: #{tpu_custom_call.1} parent=1 // pred_fallthru
      _
    %v70 = vld [vmem:[#allocation2] sm:$0xf]
    %v71 = vld [vmem:[#allocation5] sm:$0xf]
    %v72 = vld [vmem:[#allocation7] sm:$0xf]
    %v73 = vld [vmem:[#allocation7 + $0x4] sm:$0xf]
    %vm74 = vcmask 64512
    %v76 = vsel %vm74, %v70, 0
    %vm78 = vcmask 1043456
    %v80 = vsel %vm78, %v71, 0
    %82 = vmatprep.subr.bf16.mxu0 0
    %83 = vmatpush1.bf16.msra.mxu0 %v80
    %84 = vmatprep.subr.bf16.mxu0 0
    %85 = vmatpush1.bf16.msra.mxu0 0
    %86 = vmatprep.subr.bf16.mxu0 0
    %87 = vmatpush1.bf16.msra.mxu0 0
    %88 = vmatprep.subr.bf16.mxu0 0
    %89 = vmatpush1.bf16.msra.mxu0 0
    %90 = vmatprep.subr.bf16.mxu0 0
    %91 = vmatpush1.bf16.msra.mxu0 0
    %92 = vmatprep.subr.bf16.mxu0 0
    %93 = vmatpush1.bf16.msra.mxu0 0
    %94 = vmatprep.subr.bf16.mxu0 0
    %95 = vmatpush1.bf16.msra.mxu0 0
    %96 = vmatprep.subr.bf16.mxu0 0
    %97 = vmatpush1.bf16.msra.mxu0 0
    %98 = vmatprep.subr.bf16.mxu0 0
    %99 = vmatpush1.bf16.msra.mxu0 0
    %100 = vmatprep.subr.bf16.mxu0 0
    %101 = vmatpush1.bf16.msra.mxu0 0
    %102 = vmatprep.subr.bf16.mxu0 0
    %103 = vmatpush1.bf16.msra.mxu0 0
    %104 = vmatprep.subr.bf16.mxu0 0
    %105 = vmatpush1.bf16.msra.mxu0 0
    %106 = vmatprep.subr.bf16.mxu0 0
    %107 = vmatpush1.bf16.msra.mxu0 0
    %108 = vmatprep.subr.bf16.mxu0 0
    %109 = vmatpush1.bf16.msra.mxu0 0
    %110 = vmatprep.subr.bf16.mxu0 0
    %111 = vmatpush1.bf16.msra.mxu0 0
    %112 = vmatprep.subr.bf16.mxu0 0
    %113 = vmatpush1.bf16.msra.mxu0 0
    %114 = vmatprep.mubr.bf16.mxu0 0
    %115 = vmatmul.mubr.bf16.gmra.mrb[0].mxu0 %v76
    %v116 = vpop.f32.mrb[0].mxu0
    %v117 = vadd.f32 0.0, %v116
    %v118 = vpop.f32.mrb[0].mxu0
    %v119 = vpop.f32.mrb[0].mxu0
    %v120 = vpop.f32.mrb[0].mxu0
    %121 = vdwg.mxu0
    %v122 = vpack.c.bf16 %v117, %v117
    %v123 = vld [vmem:[#allocation8] sm:$0x1]
    %v124 = vlaneseq
    %v125 = vshrl.u32 %v124, 7
    %v126 = vsub.s32 0, %v125
    %v127 = vrot.slane %v123, %v126
    %v130 = vunpack.c.l.b16 %v72
    %v131 = vunpack.c.l.b16 %v73
    %v132 = vpack.c.b16 %v131, %v130
    %vm134 = vcmask 130048
    %v136 = vsel %vm134, %v122, 0
    %138 = vmatprep.subr.bf16.mxu0 0
    %139 = vmatpush1.bf16.msra.mxu0 %v132
    %140 = vmatprep.subr.bf16.mxu0 0
    %141 = vmatpush1.bf16.msra.mxu0 0
    %142 = vmatprep.subr.bf16.mxu0 0
    %143 = vmatpush1.bf16.msra.mxu0 0
    %144 = vmatprep.subr.bf16.mxu0 0
    %145 = vmatpush1.bf16.msra.mxu0 0
    %146 = vmatprep.subr.bf16.mxu0 0
    %147 = vmatpush1.bf16.msra.mxu0 0
    %148 = vmatprep.subr.bf16.mxu0 0
    %149 = vmatpush1.bf16.msra.mxu0 0
    %150 = vmatprep.subr.bf16.mxu0 0
    %151 = vmatpush1.bf16.msra.mxu0 0
    %152 = vmatprep.subr.bf16.mxu0 0
    %153 = vmatpush1.bf16.msra.mxu0 0
    %154 = vmatprep.subr.bf16.mxu0 0
    %155 = vmatpush1.bf16.msra.mxu0 0
    %156 = vmatprep.subr.bf16.mxu0 0
    %157 = vmatpush1.bf16.msra.mxu0 0
    %158 = vmatprep.subr.bf16.mxu0 0
    %159 = vmatpush1.bf16.msra.mxu0 0
    %160 = vmatprep.subr.bf16.mxu0 0
    %161 = vmatpush1.bf16.msra.mxu0 0
    %162 = vmatprep.subr.bf16.mxu0 0
    %163 = vmatpush1.bf16.msra.mxu0 0
    %164 = vmatprep.subr.bf16.mxu0 0
    %165 = vmatpush1.bf16.msra.mxu0 0
    %166 = vmatprep.subr.bf16.mxu0 0
    %167 = vmatpush1.bf16.msra.mxu0 0
    %168 = vmatprep.subr.bf16.mxu0 0
    %169 = vmatpush1.bf16.msra.mxu0 0
    %170 = vmatprep.mubr.bf16.mxu0 0
    %171 = vmatmul.mubr.bf16.gmra.mrb[0].mxu0 %v136
    %v172 = vpop.f32.mrb[0].mxu0
    %v173 = vadd.f32 %v127, %v172
    %v174 = vpop.f32.mrb[0].mxu0
    %v175 = vpop.f32.mrb[0].mxu0
    %v176 = vpop.f32.mrb[0].mxu0
    %177 = vdwg.mxu0
    %v178 = vpack.c.bf16 %v173, %v173
    %v179 = vld [vmem:[#allocation7 + $0x8] sm:$0xf]
    %v180 = vld [vmem:[#allocation7 + $0xc] sm:$0xf]
    %v181 = vld [vmem:[#allocation7 + $0x10] sm:$0xf]
    %v182 = vld [vmem:[#allocation7 + $0x14] sm:$0xf]
    %v183 = vld [vmem:[#allocation8 + $0x1] sm:$0x1]
    %v184 = vlaneseq
    %v185 = vshrl.u32 %v184, 7
    %v186 = vsub.s32 0, %v185
    %v187 = vrot.slane %v183, %v186
    %v192 = vunpack.c.l.b16 %v179
    %v193 = vunpack.c.l.b16 %v180
    %v194 = vunpack.c.l.b16 %v181
    %v195 = vunpack.c.l.b16 %v182
    %v196 = vpack.c.b16 %v193, %v192
    %v197 = vpack.c.b16 %v195, %v194
    %vm200 = vcmask 261120
    %v202 = vsel %vm200, %v178, 0
    %204 = vmatprep.subr.bf16.mxu0 0
    %205 = vmatpush1.bf16.msra.mxu0 %v196
    %206 = vmatprep.subr.bf16.mxu0 0
    %207 = vmatpush1.bf16.msra.mxu0 %v197
    %208 = vmatprep.subr.bf16.mxu0 0
    %209 = vmatpush1.bf16.msra.mxu0 0
    %210 = vmatprep.subr.bf16.mxu0 0
    %211 = vmatpush1.bf16.msra.mxu0 0
    %212 = vmatprep.subr.bf16.mxu0 0
    %213 = vmatpush1.bf16.msra.mxu0 0
    %214 = vmatprep.subr.bf16.mxu0 0
    %215 = vmatpush1.bf16.msra.mxu0 0
    %216 = vmatprep.subr.bf16.mxu0 0
    %217 = vmatpush1.bf16.msra.mxu0 0
    %218 = vmatprep.subr.bf16.mxu0 0
    %219 = vmatpush1.bf16.msra.mxu0 0
    %220 = vmatprep.subr.bf16.mxu0 0
    %221 = vmatpush1.bf16.msra.mxu0 0
    %222 = vmatprep.subr.bf16.mxu0 0
    %223 = vmatpush1.bf16.msra.mxu0 0
    %224 = vmatprep.subr.bf16.mxu0 0
    %225 = vmatpush1.bf16.msra.mxu0 0
    %226 = vmatprep.subr.bf16.mxu0 0
    %227 = vmatpush1.bf16.msra.mxu0 0
    %228 = vmatprep.subr.bf16.mxu0 0
    %229 = vmatpush1.bf16.msra.mxu0 0
    %230 = vmatprep.subr.bf16.mxu0 0
    %231 = vmatpush1.bf16.msra.mxu0 0
    %232 = vmatprep.subr.bf16.mxu0 0
    %233 = vmatpush1.bf16.msra.mxu0 0
    %234 = vmatprep.subr.bf16.mxu0 0
    %235 = vmatpush1.bf16.msra.mxu0 0
    %236 = vmatprep.mubr.bf16.mxu0 0
    %237 = vmatmul.mubr.bf16.gmra.mrb[0].mxu0 %v202
    %v238 = vpop.f32.mrb[0].mxu0
    %v239 = vadd.f32 %v187, %v238
    %v240 = vpop.f32.mrb[0].mxu0
    %v241 = vpop.f32.mrb[0].mxu0
    %v242 = vpop.f32.mrb[0].mxu0
    %243 = vdwg.mxu0
    %v244 = vpack.c.bf16 %v239, %v239
    %246 = vrot.lane.b32.xlu0 %v244, 120
    %v247 = vpop.permute.xlu0 %246
    %248 = vrot.lane.b32.xlu0 %v244, 112
    %v249 = vpop.permute.xlu0 %248
    %250 = vrot.lane.b32.xlu0 %v244, 104
    %v251 = vpop.permute.xlu0 %250
    %252 = vrot.lane.b32.xlu0 %v244, 96
    %v253 = vpop.permute.xlu0 %252
    %v255 = vsel %vm74, %v244, 0
    %v258 = vsel %vm74, %v253, 0
    %260 = vmatprep.subr.bf16.mxu0 0
    %261 = vmatpush1.bf16.xpose.msra.mxu0 %v258
    %262 = vmatprep.subr.bf16.mxu0 0
    %263 = vmatpush1.bf16.xpose.msra.mxu0 0
    %264 = vmatprep.subr.bf16.mxu0 0
    %265 = vmatpush1.bf16.xpose.msra.mxu0 0
    %266 = vmatprep.subr.bf16.mxu0 0
    %267 = vmatpush1.bf16.xpose.msra.mxu0 0
    %268 = vmatprep.subr.bf16.mxu0 0
    %269 = vmatpush1.bf16.xpose.msra.mxu0 0
    %270 = vmatprep.subr.bf16.mxu0 0
    %271 = vmatpush1.bf16.xpose.msra.mxu0 0
    %272 = vmatprep.subr.bf16.mxu0 0
    %273 = vmatpush1.bf16.xpose.msra.mxu0 0
    %274 = vmatprep.subr.bf16.mxu0 0
    %275 = vmatpush1.bf16.xpose.msra.mxu0 0
    %276 = vmatprep.subr.bf16.mxu0 0
    %277 = vmatpush1.bf16.xpose.msra.mxu0 0
    %278 = vmatprep.subr.bf16.mxu0 0
    %279 = vmatpush1.bf16.xpose.msra.mxu0 0
    %280 = vmatprep.subr.bf16.mxu0 0
    %281 = vmatpush1.bf16.xpose.msra.mxu0 0
    %282 = vmatprep.subr.bf16.mxu0 0
    %283 = vmatpush1.bf16.xpose.msra.mxu0 0
    %284 = vmatprep.subr.bf16.mxu0 0
    %285 = vmatpush1.bf16.xpose.msra.mxu0 0
    %286 = vmatprep.subr.bf16.mxu0 0
    %287 = vmatpush1.bf16.xpose.msra.mxu0 0
    %288 = vmatprep.subr.bf16.mxu0 0
    %289 = vmatpush1.bf16.xpose.msra.mxu0 0
    %290 = vmatprep.subr.bf16.mxu0 0
    %291 = vmatpush1.bf16.xpose.msra.mxu0 0
    %292 = vmatprep.mubr.bf16.mxu0 0
    %293 = vmatmul.mubr.bf16.gmra.mrb[0].mxu0 %v255
    %v294 = vpop.f32.mrb[0].mxu0
    %v295 = vadd.f32 0.0, %v294
    %v296 = vpop.f32.mrb[0].mxu0
    %v297 = vpop.f32.mrb[0].mxu0
    %v298 = vpop.f32.mrb[0].mxu0
    %299 = vdwg.mxu0
    %300 = vrot.lane.b32.xlu0 %v247, 96
    %v301 = vpop.permute.xlu0 %300
    %v303 = vsel %vm74, %v247, 0
    %v306 = vsel %vm74, %v301, 0
    %308 = vmatprep.subr.bf16.mxu0 0
    %309 = vmatpush1.bf16.xpose.msra.mxu0 %v306
    %310 = vmatprep.subr.bf16.mxu0 0
    %311 = vmatpush1.bf16.xpose.msra.mxu0 0
    %312 = vmatprep.subr.bf16.mxu0 0
    %313 = vmatpush1.bf16.xpose.msra.mxu0 0
    %314 = vmatprep.subr.bf16.mxu0 0
    %315 = vmatpush1.bf16.xpose.msra.mxu0 0
    %316 = vmatprep.subr.bf16.mxu0 0
    %317 = vmatpush1.bf16.xpose.msra.mxu0 0
    %318 = vmatprep.subr.bf16.mxu0 0
    %319 = vmatpush1.bf16.xpose.msra.mxu0 0
    %320 = vmatprep.subr.bf16.mxu0 0
    %321 = vmatpush1.bf16.xpose.msra.mxu0 0
    %322 = vmatprep.subr.bf16.mxu0 0
    %323 = vmatpush1.bf16.xpose.msra.mxu0 0
    %324 = vmatprep.subr.bf16.mxu0 0
    %325 = vmatpush1.bf16.xpose.msra.mxu0 0
    %326 = vmatprep.subr.bf16.mxu0 0
    %327 = vmatpush1.bf16.xpose.msra.mxu0 0
    %328 = vmatprep.subr.bf16.mxu0 0
    %329 = vmatpush1.bf16.xpose.msra.mxu0 0
    %330 = vmatprep.subr.bf16.mxu0 0
    %331 = vmatpush1.bf16.xpose.msra.mxu0 0
    %332 = vmatprep.subr.bf16.mxu0 0
    %333 = vmatpush1.bf16.xpose.msra.mxu0 0
    %334 = vmatprep.subr.bf16.mxu0 0
    %335 = vmatpush1.bf16.xpose.msra.mxu0 0
    %336 = vmatprep.subr.bf16.mxu0 0
    %337 = vmatpush1.bf16.xpose.msra.mxu0 0
    %338 = vmatprep.subr.bf16.mxu0 0
    %339 = vmatpush1.bf16.xpose.msra.mxu0 0
    %340 = vmatprep.mubr.bf16.mxu0 0
    %341 = vmatmul.mubr.bf16.gmra.mrb[0].mxu0 %v303
    %v342 = vpop.f32.mrb[0].mxu0
    %v343 = vadd.f32 0.0, %v342
    %v344 = vpop.f32.mrb[0].mxu0
    %v345 = vpop.f32.mrb[0].mxu0
    %v346 = vpop.f32.mrb[0].mxu0
    %347 = vdwg.mxu0
    %348 = vrot.lane.b32.xlu0 %v249, 96
    %v349 = vpop.permute.xlu0 %348
    %v351 = vsel %vm74, %v249, 0
    %v354 = vsel %vm74, %v349, 0
    %356 = vmatprep.subr.bf16.mxu0 0
    %357 = vmatpush1.bf16.xpose.msra.mxu0 %v354
    %358 = vmatprep.subr.bf16.mxu0 0
    %359 = vmatpush1.bf16.xpose.msra.mxu0 0
    %360 = vmatprep.subr.bf16.mxu0 0
    %361 = vmatpush1.bf16.xpose.msra.mxu0 0
    %362 = vmatprep.subr.bf16.mxu0 0
    %363 = vmatpush1.bf16.xpose.msra.mxu0 0
    %364 = vmatprep.subr.bf16.mxu0 0
    %365 = vmatpush1.bf16.xpose.msra.mxu0 0
    %366 = vmatprep.subr.bf16.mxu0 0
    %367 = vmatpush1.bf16.xpose.msra.mxu0 0
    %368 = vmatprep.subr.bf16.mxu0 0
    %369 = vmatpush1.bf16.xpose.msra.mxu0 0
    %370 = vmatprep.subr.bf16.mxu0 0
    %371 = vmatpush1.bf16.xpose.msra.mxu0 0
    %372 = vmatprep.subr.bf16.mxu0 0
    %373 = vmatpush1.bf16.xpose.msra.mxu0 0
    %374 = vmatprep.subr.bf16.mxu0 0
    %375 = vmatpush1.bf16.xpose.msra.mxu0 0
    %376 = vmatprep.subr.bf16.mxu0 0
    %377 = vmatpush1.bf16.xpose.msra.mxu0 0
    %378 = vmatprep.subr.bf16.mxu0 0
    %379 = vmatpush1.bf16.xpose.msra.mxu0 0
    %380 = vmatprep.subr.bf16.mxu0 0
    %381 = vmatpush1.bf16.xpose.msra.mxu0 0
    %382 = vmatprep.subr.bf16.mxu0 0
    %383 = vmatpush1.bf16.xpose.msra.mxu0 0
    %384 = vmatprep.subr.bf16.mxu0 0
    %385 = vmatpush1.bf16.xpose.msra.mxu0 0
    %386 = vmatprep.subr.bf16.mxu0 0
    %387 = vmatpush1.bf16.xpose.msra.mxu0 0
    %388 = vmatprep.mubr.bf16.mxu0 0
    %389 = vmatmul.mubr.bf16.gmra.mrb[0].mxu0 %v351
    %v390 = vpop.f32.mrb[0].mxu0
    %v391 = vadd.f32 0.0, %v390
    %v392 = vpop.f32.mrb[0].mxu0
    %v393 = vpop.f32.mrb[0].mxu0
    %v394 = vpop.f32.mrb[0].mxu0
    %395 = vdwg.mxu0
    %396 = vrot.lane.b32.xlu0 %v251, 96
    %v397 = vpop.permute.xlu0 %396
    %v399 = vsel %vm74, %v251, 0
    %v402 = vsel %vm74, %v397, 0
    %404 = vmatprep.subr.bf16.mxu0 0
    %405 = vmatpush1.bf16.xpose.msra.mxu0 %v402
    %406 = vmatprep.subr.bf16.mxu0 0
    %407 = vmatpush1.bf16.xpose.msra.mxu0 0
    %408 = vmatprep.subr.bf16.mxu0 0
    %409 = vmatpush1.bf16.xpose.msra.mxu0 0
    %410 = vmatprep.subr.bf16.mxu0 0
    %411 = vmatpush1.bf16.xpose.msra.mxu0 0
    %412 = vmatprep.subr.bf16.mxu0 0
    %413 = vmatpush1.bf16.xpose.msra.mxu0 0
    %414 = vmatprep.subr.bf16.mxu0 0
    %415 = vmatpush1.bf16.xpose.msra.mxu0 0
    %416 = vmatprep.subr.bf16.mxu0 0
    %417 = vmatpush1.bf16.xpose.msra.mxu0 0
    %418 = vmatprep.subr.bf16.mxu0 0
    %419 = vmatpush1.bf16.xpose.msra.mxu0 0
    %420 = vmatprep.subr.bf16.mxu0 0
    %421 = vmatpush1.bf16.xpose.msra.mxu0 0
    %422 = vmatprep.subr.bf16.mxu0 0
    %423 = vmatpush1.bf16.xpose.msra.mxu0 0
    %424 = vmatprep.subr.bf16.mxu0 0
    %425 = vmatpush1.bf16.xpose.msra.mxu0 0
    %426 = vmatprep.subr.bf16.mxu0 0
    %427 = vmatpush1.bf16.xpose.msra.mxu0 0
    %428 = vmatprep.subr.bf16.mxu0 0
    %429 = vmatpush1.bf16.xpose.msra.mxu0 0
    %430 = vmatprep.subr.bf16.mxu0 0
    %431 = vmatpush1.bf16.xpose.msra.mxu0 0
    %432 = vmatprep.subr.bf16.mxu0 0
    %433 = vmatpush1.bf16.xpose.msra.mxu0 0
    %434 = vmatprep.subr.bf16.mxu0 0
    %435 = vmatpush1.bf16.xpose.msra.mxu0 0
    %436 = vmatprep.mubr.bf16.mxu0 0
    %437 = vmatmul.mubr.bf16.gmra.mrb[0].mxu0 %v399
    %v438 = vpop.f32.mrb[0].mxu0
    %v439 = vadd.f32 0.0, %v438
    %v440 = vpop.f32.mrb[0].mxu0
    %v441 = vpop.f32.mrb[0].mxu0
    %v442 = vpop.f32.mrb[0].mxu0
    %443 = vdwg.mxu0
    %v444 = vsel %vm74, %v295, -inf
    %445 = vmax.xlane.f32.xlu0 %v444
    %v446 = vpop.xlane.xlu0 %445
    %v447 = vsel %vm74, %v343, -inf
    %448 = vmax.xlane.f32.xlu0 %v447
    %v449 = vpop.xlane.xlu0 %448
    %v450 = vsel %vm74, %v391, -inf
    %451 = vmax.xlane.f32.xlu0 %v450
    %v452 = vpop.xlane.xlu0 %451
    %v453 = vsel %vm74, %v439, -inf
    %454 = vmax.xlane.f32.xlu0 %v453
    %v455 = vpop.xlane.xlu0 %454
    %v456 = vsub.f32 %v295, %v446
    %v457 = vsub.f32 %v343, %v449
    %v458 = vsub.f32 %v391, %v452
    %v459 = vsub.f32 %v439, %v455
    %v460 = vmul.f32 %v456, 1.442695
    %v461 = vpow.pop %v460
    %v462 = vmul.f32 %v457, 1.442695
    %v463 = vpow.pop %v462
    %v464 = vmul.f32 %v458, 1.442695
    %v465 = vpow.pop %v464
    %v466 = vmul.f32 %v459, 1.442695
    %v467 = vpow.pop %v466
    %v468 = vsel %vm74, %v461, 0.0
    %469 = vadd.xlane.f32.xlu0 %v468
    %v470 = vpop.xlane.xlu0 %469
    %v471 = vsel %vm74, %v463, 0.0
    %472 = vadd.xlane.f32.xlu0 %v471
    %v473 = vpop.xlane.xlu0 %472
    %v474 = vsel %vm74, %v465, 0.0
    %475 = vadd.xlane.f32.xlu0 %v474
    %v476 = vpop.xlane.xlu0 %475
    %v477 = vsel %vm74, %v467, 0.0
    %478 = vadd.xlane.f32.xlu0 %v477
    %v479 = vpop.xlane.xlu0 %478
    %v480 = vrcp.pop %v470
    %v481 = vrcp.pop %v473
    %v482 = vrcp.pop %v476
    %v483 = vrcp.pop %v479
    %v484 = vmul.f32 %v461, %v480
    %v485 = vmul.f32 %v463, %v481
    %v486 = vmul.f32 %v465, %v482
    %v487 = vmul.f32 %v467, %v483
    %v488 = vpack.c.bf16 %v484, %v484
    %v489 = vpack.c.bf16 %v485, %v485
    %v490 = vpack.c.bf16 %v486, %v486
    %v491 = vpack.c.bf16 %v487, %v487
    %492 = vrot.lane.b32.xlu0 %v244, 64
    %v493 = vpop.permute.xlu0 %492
    %v495 = vsel %vm74, %v488, 0
    %v498 = vsel %vm78, %v493, 0
    %500 = vmatprep.subr.bf16.mxu0 0
    %501 = vmatpush1.bf16.msra.mxu0 %v498
    %502 = vmatprep.subr.bf16.mxu0 0
    %503 = vmatpush1.bf16.msra.mxu0 0
    %504 = vmatprep.subr.bf16.mxu0 0
    %505 = vmatpush1.bf16.msra.mxu0 0
    %506 = vmatprep.subr.bf16.mxu0 0
    %507 = vmatpush1.bf16.msra.mxu0 0
    %508 = vmatprep.subr.bf16.mxu0 0
    %509 = vmatpush1.bf16.msra.mxu0 0
    %510 = vmatprep.subr.bf16.mxu0 0
    %511 = vmatpush1.bf16.msra.mxu0 0
    %512 = vmatprep.subr.bf16.mxu0 0
    %513 = vmatpush1.bf16.msra.mxu0 0
    %514 = vmatprep.subr.bf16.mxu0 0
    %515 = vmatpush1.bf16.msra.mxu0 0
    %516 = vmatprep.subr.bf16.mxu0 0
    %517 = vmatpush1.bf16.msra.mxu0 0
    %518 = vmatprep.subr.bf16.mxu0 0
    %519 = vmatpush1.bf16.msra.mxu0 0
    %520 = vmatprep.subr.bf16.mxu0 0
    %521 = vmatpush1.bf16.msra.mxu0 0
    %522 = vmatprep.subr.bf16.mxu0 0
    %523 = vmatpush1.bf16.msra.mxu0 0
    %524 = vmatprep.subr.bf16.mxu0 0
    %525 = vmatpush1.bf16.msra.mxu0 0
    %526 = vmatprep.subr.bf16.mxu0 0
    %527 = vmatpush1.bf16.msra.mxu0 0
    %528 = vmatprep.subr.bf16.mxu0 0
    %529 = vmatpush1.bf16.msra.mxu0 0
    %530 = vmatprep.subr.bf16.mxu0 0
    %531 = vmatpush1.bf16.msra.mxu0 0
    %532 = vmatprep.mubr.bf16.mxu0 0
    %533 = vmatmul.mubr.bf16.gmra.mrb[0].mxu0 %v495
    %v534 = vpop.f32.mrb[0].mxu0
    %v535 = vadd.f32 0.0, %v534
    %v536 = vpop.f32.mrb[0].mxu0
    %v537 = vpop.f32.mrb[0].mxu0
    %v538 = vpop.f32.mrb[0].mxu0
    %539 = vdwg.mxu0
    %540 = vrot.lane.b32.xlu0 %v247, 64
    %v541 = vpop.permute.xlu0 %540
    %v543 = vsel %vm74, %v489, 0
    %v546 = vsel %vm78, %v541, 0
    %548 = vmatprep.subr.bf16.mxu0 0
    %549 = vmatpush1.bf16.msra.mxu0 %v546
    %550 = vmatprep.subr.bf16.mxu0 0
    %551 = vmatpush1.bf16.msra.mxu0 0
    %552 = vmatprep.subr.bf16.mxu0 0
    %553 = vmatpush1.bf16.msra.mxu0 0
    %554 = vmatprep.subr.bf16.mxu0 0
    %555 = vmatpush1.bf16.msra.mxu0 0
    %556 = vmatprep.subr.bf16.mxu0 0
    %557 = vmatpush1.bf16.msra.mxu0 0
    %558 = vmatprep.subr.bf16.mxu0 0
    %559 = vmatpush1.bf16.msra.mxu0 0
    %560 = vmatprep.subr.bf16.mxu0 0
    %561 = vmatpush1.bf16.msra.mxu0 0
    %562 = vmatprep.subr.bf16.mxu0 0
    %563 = vmatpush1.bf16.msra.mxu0 0
    %564 = vmatprep.subr.bf16.mxu0 0
    %565 = vmatpush1.bf16.msra.mxu0 0
    %566 = vmatprep.subr.bf16.mxu0 0
    %567 = vmatpush1.bf16.msra.mxu0 0
    %568 = vmatprep.subr.bf16.mxu0 0
    %569 = vmatpush1.bf16.msra.mxu0 0
    %570 = vmatprep.subr.bf16.mxu0 0
    %571 = vmatpush1.bf16.msra.mxu0 0
    %572 = vmatprep.subr.bf16.mxu0 0
    %573 = vmatpush1.bf16.msra.mxu0 0
    %574 = vmatprep.subr.bf16.mxu0 0
    %575 = vmatpush1.bf16.msra.mxu0 0
    %576 = vmatprep.subr.bf16.mxu0 0
    %577 = vmatpush1.bf16.msra.mxu0 0
    %578 = vmatprep.subr.bf16.mxu0 0
    %579 = vmatpush1.bf16.msra.mxu0 0
    %580 = vmatprep.mubr.bf16.mxu0 0
    %581 = vmatmul.mubr.bf16.gmra.mrb[0].mxu0 %v543
    %v582 = vpop.f32.mrb[0].mxu0
    %v583 = vadd.f32 0.0, %v582
    %v584 = vpop.f32.mrb[0].mxu0
    %v585 = vpop.f32.mrb[0].mxu0
    %v586 = vpop.f32.mrb[0].mxu0
    %587 = vdwg.mxu0
    %588 = vrot.lane.b32.xlu0 %v249, 64
    %v589 = vpop.permute.xlu0 %588
    %v591 = vsel %vm74, %v490, 0
    %v594 = vsel %vm78, %v589, 0
    %596 = vmatprep.subr.bf16.mxu0 0
    %597 = vmatpush1.bf16.msra.mxu0 %v594
    %598 = vmatprep.subr.bf16.mxu0 0
    %599 = vmatpush1.bf16.msra.mxu0 0
    %600 = vmatprep.subr.bf16.mxu0 0
    %601 = vmatpush1.bf16.msra.mxu0 0
    %602 = vmatprep.subr.bf16.mxu0 0
    %603 = vmatpush1.bf16.msra.mxu0 0
    %604 = vmatprep.subr.bf16.mxu0 0
    %605 = vmatpush1.bf16.msra.mxu0 0
    %606 = vmatprep.subr.bf16.mxu0 0
    %607 = vmatpush1.bf16.msra.mxu0 0
    %608 = vmatprep.subr.bf16.mxu0 0
    %609 = vmatpush1.bf16.msra.mxu0 0
    %610 = vmatprep.subr.bf16.mxu0 0
    %611 = vmatpush1.bf16.msra.mxu0 0
    %612 = vmatprep.subr.bf16.mxu0 0
    %613 = vmatpush1.bf16.msra.mxu0 0
    %614 = vmatprep.subr.bf16.mxu0 0
    %615 = vmatpush1.bf16.msra.mxu0 0
    %616 = vmatprep.subr.bf16.mxu0 0
    %617 = vmatpush1.bf16.msra.mxu0 0
    %618 = vmatprep.subr.bf16.mxu0 0
    %619 = vmatpush1.bf16.msra.mxu0 0
    %620 = vmatprep.subr.bf16.mxu0 0
    %621 = vmatpush1.bf16.msra.mxu0 0
    %622 = vmatprep.subr.bf16.mxu0 0
    %623 = vmatpush1.bf16.msra.mxu0 0
    %624 = vmatprep.subr.bf16.mxu0 0
    %625 = vmatpush1.bf16.msra.mxu0 0
    %626 = vmatprep.subr.bf16.mxu0 0
    %627 = vmatpush1.bf16.msra.mxu0 0
    %628 = vmatprep.mubr.bf16.mxu0 0
    %629 = vmatmul.mubr.bf16.gmra.mrb[0].mxu0 %v591
    %v630 = vpop.f32.mrb[0].mxu0
    %v631 = vadd.f32 0.0, %v630
    %v632 = vpop.f32.mrb[0].mxu0
    %v633 = vpop.f32.mrb[0].mxu0
    %v634 = vpop.f32.mrb[0].mxu0
    %635 = vdwg.mxu0
    %636 = vrot.lane.b32.xlu0 %v251, 64
    %v637 = vpop.permute.xlu0 %636
    %v639 = vsel %vm74, %v491, 0
    %v642 = vsel %vm78, %v637, 0
    %644 = vmatprep.subr.bf16.mxu0 0
    %645 = vmatpush1.bf16.msra.mxu0 %v642
    %646 = vmatprep.subr.bf16.mxu0 0
    %647 = vmatpush1.bf16.msra.mxu0 0
    %648 = vmatprep.subr.bf16.mxu0 0
    %649 = vmatpush1.bf16.msra.mxu0 0
    %650 = vmatprep.subr.bf16.mxu0 0
    %651 = vmatpush1.bf16.msra.mxu0 0
    %652 = vmatprep.subr.bf16.mxu0 0
    %653 = vmatpush1.bf16.msra.mxu0 0
    %654 = vmatprep.subr.bf16.mxu0 0
    %655 = vmatpush1.bf16.msra.mxu0 0
    %656 = vmatprep.subr.bf16.mxu0 0
    %657 = vmatpush1.bf16.msra.mxu0 0
    %658 = vmatprep.subr.bf16.mxu0 0
    %659 = vmatpush1.bf16.msra.mxu0 0
    %660 = vmatprep.subr.bf16.mxu0 0
    %661 = vmatpush1.bf16.msra.mxu0 0
    %662 = vmatprep.subr.bf16.mxu0 0
    %663 = vmatpush1.bf16.msra.mxu0 0
    %664 = vmatprep.subr.bf16.mxu0 0
    %665 = vmatpush1.bf16.msra.mxu0 0
    %666 = vmatprep.subr.bf16.mxu0 0
    %667 = vmatpush1.bf16.msra.mxu0 0
    %668 = vmatprep.subr.bf16.mxu0 0
    %669 = vmatpush1.bf16.msra.mxu0 0
    %670 = vmatprep.subr.bf16.mxu0 0
    %671 = vmatpush1.bf16.msra.mxu0 0
    %672 = vmatprep.subr.bf16.mxu0 0
    %673 = vmatpush1.bf16.msra.mxu0 0
    %674 = vmatprep.subr.bf16.mxu0 0
    %675 = vmatpush1.bf16.msra.mxu0 0
    %676 = vmatprep.mubr.bf16.mxu0 0
    %677 = vmatmul.mubr.bf16.gmra.mrb[0].mxu0 %v639
    %v678 = vpop.f32.mrb[0].mxu0
    %v679 = vadd.f32 0.0, %v678
    %v680 = vpop.f32.mrb[0].mxu0
    %v681 = vpop.f32.mrb[0].mxu0
    %v682 = vpop.f32.mrb[0].mxu0
    %683 = vdwg.mxu0
    %685 = vrot.lane.b32.xlu0 %v583, 8
    %v686 = vpop.permute.xlu0 %685
    %689 = vrot.lane.b32.xlu0 %v631, 16
    %v690 = vpop.permute.xlu0 %689
    %693 = vrot.lane.b32.xlu0 %v679, 24
    %v694 = vpop.permute.xlu0 %693
    %v696 = vsel %vm74, %v535, %v686
    %v697 = vsel %vm134, %v696, %v690
    %vm698 = vcmask 195584
    %v699 = vsel %vm698, %v697, %v694
    %v700 = vpack.c.bf16 %v699, %v699
    %v701 = vld [vmem:[#allocation7 + $0x18] sm:$0xf]
    %v702 = vld [vmem:[#allocation7 + $0x1c] sm:$0xf]
    %v703 = vld [vmem:[#allocation7 + $0x20] sm:$0xf]
    %v704 = vld [vmem:[#allocation7 + $0x24] sm:$0xf]
    %v705 = vld [vmem:[#allocation8 + $0x2] sm:$0x1]
    %v706 = vlaneseq
    %v707 = vshrl.u32 %v706, 7
    %v708 = vsub.s32 0, %v707
    %v709 = vrot.slane %v705, %v708
    %v714 = vunpack.c.l.b16 %v701
    %v715 = vunpack.c.l.b16 %v702
    %v716 = vunpack.c.l.b16 %v703
    %v717 = vunpack.c.l.b16 %v704
    %v718 = vpack.c.b16 %v715, %v714
    %v719 = vpack.c.b16 %v717, %v716
    %v723 = vsel %vm200, %v700, 0
    %725 = vmatprep.subr.bf16.mxu0 0
    %726 = vmatpush1.bf16.msra.mxu0 %v718
    %727 = vmatprep.subr.bf16.mxu0 0
    %728 = vmatpush1.bf16.msra.mxu0 %v719
    %729 = vmatprep.subr.bf16.mxu0 0
    %730 = vmatpush1.bf16.msra.mxu0 0
    %731 = vmatprep.subr.bf16.mxu0 0
    %732 = vmatpush1.bf16.msra.mxu0 0
    %733 = vmatprep.subr.bf16.mxu0 0
    %734 = vmatpush1.bf16.msra.mxu0 0
    %735 = vmatprep.subr.bf16.mxu0 0
    %736 = vmatpush1.bf16.msra.mxu0 0
    %737 = vmatprep.subr.bf16.mxu0 0
    %738 = vmatpush1.bf16.msra.mxu0 0
    %739 = vmatprep.subr.bf16.mxu0 0
    %740 = vmatpush1.bf16.msra.mxu0 0
    %741 = vmatprep.subr.bf16.mxu0 0
    %742 = vmatpush1.bf16.msra.mxu0 0
    %743 = vmatprep.subr.bf16.mxu0 0
    %744 = vmatpush1.bf16.msra.mxu0 0
    %745 = vmatprep.subr.bf16.mxu0 0
    %746 = vmatpush1.bf16.msra.mxu0 0
    %747 = vmatprep.subr.bf16.mxu0 0
    %748 = vmatpush1.bf16.msra.mxu0 0
    %749 = vmatprep.subr.bf16.mxu0 0
    %750 = vmatpush1.bf16.msra.mxu0 0
    %751 = vmatprep.subr.bf16.mxu0 0
    %752 = vmatpush1.bf16.msra.mxu0 0
    %753 = vmatprep.subr.bf16.mxu0 0
    %754 = vmatpush1.bf16.msra.mxu0 0
    %755 = vmatprep.subr.bf16.mxu0 0
    %756 = vmatpush1.bf16.msra.mxu0 0
    %757 = vmatprep.mubr.bf16.mxu0 0
    %758 = vmatmul.mubr.bf16.gmra.mrb[0].mxu0 %v723
    %v759 = vpop.f32.mrb[0].mxu0
    %v760 = vadd.f32 %v709, %v759
    %v761 = vpop.f32.mrb[0].mxu0
    %v762 = vpop.f32.mrb[0].mxu0
    %v763 = vpop.f32.mrb[0].mxu0
    %764 = vdwg.mxu0
    %v765 = vpack.c.bf16 %v760, %v760
    %v766 = vld [vmem:[#allocation7 + $0x28] sm:$0xf]
    %v767 = vld [vmem:[#allocation7 + $0x2c] sm:$0xf]
    %v768 = vld [vmem:[#allocation7 + $0x30] sm:$0xf]
    %v769 = vld [vmem:[#allocation7 + $0x34] sm:$0xf]
    %v770 = vld [vmem:[#allocation8 + $0x3] sm:$0x1]
    %v771 = vlaneseq
    %v772 = vshrl.u32 %v771, 7
    %v773 = vsub.s32 0, %v772
    %v774 = vrot.slane %v770, %v773
    %v779 = vunpack.c.l.b16 %v766
    %v780 = vunpack.c.l.b16 %v767
    %v781 = vunpack.c.l.b16 %v768
    %v782 = vunpack.c.l.b16 %v769
    %v783 = vpack.c.b16 %v780, %v779
    %v784 = vpack.c.b16 %v782, %v781
    %v788 = vsel %vm200, %v765, 0
    %790 = vmatprep.subr.bf16.mxu0 0
    %791 = vmatpush1.bf16.msra.mxu0 %v783
    %792 = vmatprep.subr.bf16.mxu0 0
    %793 = vmatpush1.bf16.msra.mxu0 %v784
    %794 = vmatprep.subr.bf16.mxu0 0
    %795 = vmatpush1.bf16.msra.mxu0 0
    %796 = vmatprep.subr.bf16.mxu0 0
    %797 = vmatpush1.bf16.msra.mxu0 0
    %798 = vmatprep.subr.bf16.mxu0 0
    %799 = vmatpush1.bf16.msra.mxu0 0
    %800 = vmatprep.subr.bf16.mxu0 0
    %801 = vmatpush1.bf16.msra.mxu0 0
    %802 = vmatprep.subr.bf16.mxu0 0
    %803 = vmatpush1.bf16.msra.mxu0 0
    %804 = vmatprep.subr.bf16.mxu0 0
    %805 = vmatpush1.bf16.msra.mxu0 0
    %806 = vmatprep.subr.bf16.mxu0 0
    %807 = vmatpush1.bf16.msra.mxu0 0
    %808 = vmatprep.subr.bf16.mxu0 0
    %809 = vmatpush1.bf16.msra.mxu0 0
    %810 = vmatprep.subr.bf16.mxu0 0
    %811 = vmatpush1.bf16.msra.mxu0 0
    %812 = vmatprep.subr.bf16.mxu0 0
    %813 = vmatpush1.bf16.msra.mxu0 0
    %814 = vmatprep.subr.bf16.mxu0 0
    %815 = vmatpush1.bf16.msra.mxu0 0
    %816 = vmatprep.subr.bf16.mxu0 0
    %817 = vmatpush1.bf16.msra.mxu0 0
    %818 = vmatprep.subr.bf16.mxu0 0
    %819 = vmatpush1.bf16.msra.mxu0 0
    %820 = vmatprep.subr.bf16.mxu0 0
    %821 = vmatpush1.bf16.msra.mxu0 0
    %822 = vmatprep.mubr.bf16.mxu0 0
    %823 = vmatmul.mubr.bf16.gmra.mrb[0].mxu0 %v788
    %v824 = vpop.f32.mrb[0].mxu0
    %v825 = vadd.f32 %v774, %v824
    %v826 = vpop.f32.mrb[0].mxu0
    %v827 = vpop.f32.mrb[0].mxu0
    %v828 = vpop.f32.mrb[0].mxu0
    %829 = vdwg.mxu0
    %v830 = vmax.f32 %v825, 0.0
    %v831 = vpack.c.bf16 %v830, %v830
    %v832 = vld [vmem:[#allocation7 + $0x38] sm:$0xf]
    %v833 = vld [vmem:[#allocation7 + $0x3c] sm:$0xf]
    %v834 = vld [vmem:[#allocation7 + $0x40] sm:$0xf]
    %v835 = vld [vmem:[#allocation7 + $0x44] sm:$0xf]
    %v836 = vld [vmem:[#allocation7 + $0x48] sm:$0xf]
    %v837 = vld [vmem:[#allocation7 + $0x4c] sm:$0xf]
    %v838 = vld [vmem:[#allocation7 + $0x50] sm:$0xf]
    %v839 = vld [vmem:[#allocation7 + $0x54] sm:$0xf]
    %v840 = vld [vmem:[#allocation7 + $0x58] sm:$0xf]
    %v841 = vld [vmem:[#allocation7 + $0x5c] sm:$0xf]
    %v842 = vld [vmem:[#allocation7 + $0x60] sm:$0xf]
    %v843 = vld [vmem:[#allocation7 + $0x64] sm:$0xf]
    %v844 = vld [vmem:[#allocation7 + $0x68] sm:$0xf]
    %v845 = vld [vmem:[#allocation7 + $0x6c] sm:$0xf]
    %v846 = vld [vmem:[#allocation7 + $0x70] sm:$0xf]
    %v847 = vld [vmem:[#allocation7 + $0x74] sm:$0xf]
    %v848 = vld [vmem:[#allocation8 + $0x4] sm:$0x1]
    %v849 = vlaneseq
    %v850 = vshrl.u32 %v849, 7
    %v851 = vsub.s32 0, %v850
    %v852 = vrot.slane %v848, %v851
    %v869 = vunpack.c.l.b16 %v832
    %v870 = vunpack.c.l.b16 %v833
    %v871 = vunpack.c.l.b16 %v834
    %v872 = vunpack.c.l.b16 %v835
    %v873 = vunpack.c.l.b16 %v836
    %v874 = vunpack.c.l.b16 %v837
    %v875 = vunpack.c.l.b16 %v838
    %v876 = vunpack.c.l.b16 %v839
    %v877 = vunpack.c.l.b16 %v840
    %v878 = vunpack.c.l.b16 %v841
    %v879 = vunpack.c.l.b16 %v842
    %v880 = vunpack.c.l.b16 %v843
    %v881 = vunpack.c.l.b16 %v844
    %v882 = vunpack.c.l.b16 %v845
    %v883 = vunpack.c.l.b16 %v846
    %v884 = vunpack.c.l.b16 %v847
    %v885 = vpack.c.b16 %v870, %v869
    %v886 = vpack.c.b16 %v872, %v871
    %v887 = vpack.c.b16 %v874, %v873
    %v888 = vpack.c.b16 %v876, %v875
    %v889 = vpack.c.b16 %v878, %v877
    %v890 = vpack.c.b16 %v880, %v879
    %v891 = vpack.c.b16 %v882, %v881
    %v892 = vpack.c.b16 %v884, %v883
    %901 = vmatprep.subr.bf16.mxu0 0
    %902 = vmatpush1.bf16.msra.mxu0 %v885
    %903 = vmatprep.subr.bf16.mxu0 0
    %904 = vmatpush1.bf16.msra.mxu0 %v886
    %905 = vmatprep.subr.bf16.mxu0 0
    %906 = vmatpush1.bf16.msra.mxu0 %v887
    %907 = vmatprep.subr.bf16.mxu0 0
    %908 = vmatpush1.bf16.msra.mxu0 %v888
    %909 = vmatprep.subr.bf16.mxu0 0
    %910 = vmatpush1.bf16.msra.mxu0 %v889
    %911 = vmatprep.subr.bf16.mxu0 0
    %912 = vmatpush1.bf16.msra.mxu0 %v890
    %913 = vmatprep.subr.bf16.mxu0 0
    %914 = vmatpush1.bf16.msra.mxu0 %v891
    %915 = vmatprep.subr.bf16.mxu0 0
    %916 = vmatpush1.bf16.msra.mxu0 %v892
    %917 = vmatprep.subr.bf16.mxu0 0
    %918 = vmatpush1.bf16.msra.mxu0 0
    %919 = vmatprep.subr.bf16.mxu0 0
    %920 = vmatpush1.bf16.msra.mxu0 0
    %921 = vmatprep.subr.bf16.mxu0 0
    %922 = vmatpush1.bf16.msra.mxu0 0
    %923 = vmatprep.subr.bf16.mxu0 0
    %924 = vmatpush1.bf16.msra.mxu0 0
    %925 = vmatprep.subr.bf16.mxu0 0
    %926 = vmatpush1.bf16.msra.mxu0 0
    %927 = vmatprep.subr.bf16.mxu0 0
    %928 = vmatpush1.bf16.msra.mxu0 0
    %929 = vmatprep.subr.bf16.mxu0 0
    %930 = vmatpush1.bf16.msra.mxu0 0
    %931 = vmatprep.subr.bf16.mxu0 0
    %932 = vmatpush1.bf16.msra.mxu0 0
    %933 = vmatprep.mubr.bf16.mxu0 0
    %934 = vmatmul.mubr.bf16.gmra.mrb[0].mxu0 %v831
    %v935 = vpop.f32.mrb[0].mxu0
    %v936 = vadd.f32 %v852, %v935
    %v937 = vpop.f32.mrb[0].mxu0
    %v938 = vpop.f32.mrb[0].mxu0
    %v939 = vpop.f32.mrb[0].mxu0
    %940 = vdwg.mxu0
    %v941 = vpack.c.bf16 %v936, %v936
    %v942 = vld [vmem:[#allocation7 + $0x78] sm:$0xf]
    %v943 = vld [vmem:[#allocation7 + $0x7c] sm:$0xf]
    %v944 = vld [vmem:[#allocation7 + $0x80] sm:$0xf]
    %v945 = vld [vmem:[#allocation7 + $0x84] sm:$0xf]
    %v946 = vld [vmem:[#allocation8 + $0x5] sm:$0x1]
    %v947 = vlaneseq
    %v948 = vshrl.u32 %v947, 7
    %v949 = vsub.s32 0, %v948
    %v950 = vrot.slane %v946, %v949
    %v955 = vunpack.c.l.b16 %v942
    %v956 = vunpack.c.l.b16 %v943
    %v957 = vunpack.c.l.b16 %v944
    %v958 = vunpack.c.l.b16 %v945
    %v959 = vpack.c.b16 %v956, %v955
    %v960 = vpack.c.b16 %v958, %v957
    %v964 = vsel %vm200, %v941, 0
    %966 = vmatprep.subr.bf16.mxu0 0
    %967 = vmatpush1.bf16.msra.mxu0 %v959
    %968 = vmatprep.subr.bf16.mxu0 0
    %969 = vmatpush1.bf16.msra.mxu0 %v960
    %970 = vmatprep.subr.bf16.mxu0 0
    %971 = vmatpush1.bf16.msra.mxu0 0
    %972 = vmatprep.subr.bf16.mxu0 0
    %973 = vmatpush1.bf16.msra.mxu0 0
    %974 = vmatprep.subr.bf16.mxu0 0
    %975 = vmatpush1.bf16.msra.mxu0 0
    %976 = vmatprep.subr.bf16.mxu0 0
    %977 = vmatpush1.bf16.msra.mxu0 0
    %978 = vmatprep.subr.bf16.mxu0 0
    %979 = vmatpush1.bf16.msra.mxu0 0
    %980 = vmatprep.subr.bf16.mxu0 0
    %981 = vmatpush1.bf16.msra.mxu0 0
    %982 = vmatprep.subr.bf16.mxu0 0
    %983 = vmatpush1.bf16.msra.mxu0 0
    %984 = vmatprep.subr.bf16.mxu0 0
    %985 = vmatpush1.bf16.msra.mxu0 0
    %986 = vmatprep.subr.bf16.mxu0 0
    %987 = vmatpush1.bf16.msra.mxu0 0
    %988 = vmatprep.subr.bf16.mxu0 0
    %989 = vmatpush1.bf16.msra.mxu0 0
    %990 = vmatprep.subr.bf16.mxu0 0
    %991 = vmatpush1.bf16.msra.mxu0 0
    %992 = vmatprep.subr.bf16.mxu0 0
    %993 = vmatpush1.bf16.msra.mxu0 0
    %994 = vmatprep.subr.bf16.mxu0 0
    %995 = vmatpush1.bf16.msra.mxu0 0
    %996 = vmatprep.subr.bf16.mxu0 0
    %997 = vmatpush1.bf16.msra.mxu0 0
    %998 = vmatprep.mubr.bf16.mxu0 0
    %999 = vmatmul.mubr.bf16.gmra.mrb[0].mxu0 %v964
    %v1000 = vpop.f32.mrb[0].mxu0
    %v1001 = vadd.f32 %v950, %v1000
    %v1002 = vpop.f32.mrb[0].mxu0
    %v1003 = vpop.f32.mrb[0].mxu0
    %v1004 = vpop.f32.mrb[0].mxu0
    %1005 = vdwg.mxu0
    %v1006 = vpack.c.bf16 %v1001, %v1001
    %1008 = vrot.lane.b32.xlu0 %v1006, 120
    %v1009 = vpop.permute.xlu0 %1008
    %1010 = vrot.lane.b32.xlu0 %v1006, 112
    %v1011 = vpop.permute.xlu0 %1010
    %1012 = vrot.lane.b32.xlu0 %v1006, 104
    %v1013 = vpop.permute.xlu0 %1012
    %1014 = vrot.lane.b32.xlu0 %v1006, 96
    %v1015 = vpop.permute.xlu0 %1014
    %v1017 = vsel %vm74, %v1006, 0
    %v1020 = vsel %vm74, %v1015, 0
    %1022 = vmatprep.subr.bf16.mxu0 0
    %1023 = vmatpush1.bf16.xpose.msra.mxu0 %v1020
    %1024 = vmatprep.subr.bf16.mxu0 0
    %1025 = vmatpush1.bf16.xpose.msra.mxu0 0
    %1026 = vmatprep.subr.bf16.mxu0 0
    %1027 = vmatpush1.bf16.xpose.msra.mxu0 0
    %1028 = vmatprep.subr.bf16.mxu0 0
    %1029 = vmatpush1.bf16.xpose.msra.mxu0 0
    %1030 = vmatprep.subr.bf16.mxu0 0
    %1031 = vmatpush1.bf16.xpose.msra.mxu0 0
    %1032 = vmatprep.subr.bf16.mxu0 0
    %1033 = vmatpush1.bf16.xpose.msra.mxu0 0
    %1034 = vmatprep.subr.bf16.mxu0 0
    %1035 = vmatpush1.bf16.xpose.msra.mxu0 0
    %1036 = vmatprep.subr.bf16.mxu0 0
    %1037 = vmatpush1.bf16.xpose.msra.mxu0 0
    %1038 = vmatprep.subr.bf16.mxu0 0
    %1039 = vmatpush1.bf16.xpose.msra.mxu0 0
    %1040 = vmatprep.subr.bf16.mxu0 0
    %1041 = vmatpush1.bf16.xpose.msra.mxu0 0
    %1042 = vmatprep.subr.bf16.mxu0 0
    %1043 = vmatpush1.bf16.xpose.msra.mxu0 0
    %1044 = vmatprep.subr.bf16.mxu0 0
    %1045 = vmatpush1.bf16.xpose.msra.mxu0 0
    %1046 = vmatprep.subr.bf16.mxu0 0
    %1047 = vmatpush1.bf16.xpose.msra.mxu0 0
    %1048 = vmatprep.subr.bf16.mxu0 0
    %1049 = vmatpush1.bf16.xpose.msra.mxu0 0
    %1050 = vmatprep.subr.bf16.mxu0 0
    %1051 = vmatpush1.bf16.xpose.msra.mxu0 0
    %1052 = vmatprep.subr.bf16.mxu0 0
    %1053 = vmatpush1.bf16.xpose.msra.mxu0 0
    %1054 = vmatprep.mubr.bf16.mxu0 0
    %1055 = vmatmul.mubr.bf16.gmra.mrb[0].mxu0 %v1017
    %v1056 = vpop.f32.mrb[0].mxu0
    %v1057 = vadd.f32 0.0, %v1056
    %v1058 = vpop.f32.mrb[0].mxu0
    %v1059 = vpop.f32.mrb[0].mxu0
    %v1060 = vpop.f32.mrb[0].mxu0
    %1061 = vdwg.mxu0
    %1062 = vrot.lane.b32.xlu0 %v1009, 96
    %v1063 = vpop.permute.xlu0 %1062
    %v1065 = vsel %vm74, %v1009, 0
    %v1068 = vsel %vm74, %v1063, 0
    %1070 = vmatprep.subr.bf16.mxu0 0
    %1071 = vmatpush1.bf16.xpose.msra.mxu0 %v1068
    %1072 = vmatprep.subr.bf16.mxu0 0
    %1073 = vmatpush1.bf16.xpose.msra.mxu0 0
    %1074 = vmatprep.subr.bf16.mxu0 0
    %1075 = vmatpush1.bf16.xpose.msra.mxu0 0
    %1076 = vmatprep.subr.bf16.mxu0 0
    %1077 = vmatpush1.bf16.xpose.msra.mxu0 0
    %1078 = vmatprep.subr.bf16.mxu0 0
    %1079 = vmatpush1.bf16.xpose.msra.mxu0 0
    %1080 = vmatprep.subr.bf16.mxu0 0
    %1081 = vmatpush1.bf16.xpose.msra.mxu0 0
    %1082 = vmatprep.subr.bf16.mxu0 0
    %1083 = vmatpush1.bf16.xpose.msra.mxu0 0
    %1084 = vmatprep.subr.bf16.mxu0 0
    %1085 = vmatpush1.bf16.xpose.msra.mxu0 0
    %1086 = vmatprep.subr.bf16.mxu0 0
    %1087 = vmatpush1.bf16.xpose.msra.mxu0 0
    %1088 = vmatprep.subr.bf16.mxu0 0
    %1089 = vmatpush1.bf16.xpose.msra.mxu0 0
    %1090 = vmatprep.subr.bf16.mxu0 0
    %1091 = vmatpush1.bf16.xpose.msra.mxu0 0
    %1092 = vmatprep.subr.bf16.mxu0 0
    %1093 = vmatpush1.bf16.xpose.msra.mxu0 0
    %1094 = vmatprep.subr.bf16.mxu0 0
    %1095 = vmatpush1.bf16.xpose.msra.mxu0 0
    %1096 = vmatprep.subr.bf16.mxu0 0
    %1097 = vmatpush1.bf16.xpose.msra.mxu0 0
    %1098 = vmatprep.subr.bf16.mxu0 0
    %1099 = vmatpush1.bf16.xpose.msra.mxu0 0
    %1100 = vmatprep.subr.bf16.mxu0 0
    %1101 = vmatpush1.bf16.xpose.msra.mxu0 0
    %1102 = vmatprep.mubr.bf16.mxu0 0
    %1103 = vmatmul.mubr.bf16.gmra.mrb[0].mxu0 %v1065
    %v1104 = vpop.f32.mrb[0].mxu0
    %v1105 = vadd.f32 0.0, %v1104
    %v1106 = vpop.f32.mrb[0].mxu0
    %v1107 = vpop.f32.mrb[0].mxu0
    %v1108 = vpop.f32.mrb[0].mxu0
    %1109 = vdwg.mxu0
    %1110 = vrot.lane.b32.xlu0 %v1011, 96
    %v1111 = vpop.permute.xlu0 %1110
    %v1113 = vsel %vm74, %v1011, 0
    %v1116 = vsel %vm74, %v1111, 0
    %1118 = vmatprep.subr.bf16.mxu0 0
    %1119 = vmatpush1.bf16.xpose.msra.mxu0 %v1116
    %1120 = vmatprep.subr.bf16.mxu0 0
    %1121 = vmatpush1.bf16.xpose.msra.mxu0 0
    %1122 = vmatprep.subr.bf16.mxu0 0
    %1123 = vmatpush1.bf16.xpose.msra.mxu0 0
    %1124 = vmatprep.subr.bf16.mxu0 0
    %1125 = vmatpush1.bf16.xpose.msra.mxu0 0
    %1126 = vmatprep.subr.bf16.mxu0 0
    %1127 = vmatpush1.bf16.xpose.msra.mxu0 0
    %1128 = vmatprep.subr.bf16.mxu0 0
    %1129 = vmatpush1.bf16.xpose.msra.mxu0 0
    %1130 = vmatprep.subr.bf16.mxu0 0
    %1131 = vmatpush1.bf16.xpose.msra.mxu0 0
    %1132 = vmatprep.subr.bf16.mxu0 0
    %1133 = vmatpush1.bf16.xpose.msra.mxu0 0
    %1134 = vmatprep.subr.bf16.mxu0 0
    %1135 = vmatpush1.bf16.xpose.msra.mxu0 0
    %1136 = vmatprep.subr.bf16.mxu0 0
    %1137 = vmatpush1.bf16.xpose.msra.mxu0 0
    %1138 = vmatprep.subr.bf16.mxu0 0
    %1139 = vmatpush1.bf16.xpose.msra.mxu0 0
    %1140 = vmatprep.subr.bf16.mxu0 0
    %1141 = vmatpush1.bf16.xpose.msra.mxu0 0
    %1142 = vmatprep.subr.bf16.mxu0 0
    %1143 = vmatpush1.bf16.xpose.msra.mxu0 0
    %1144 = vmatprep.subr.bf16.mxu0 0
    %1145 = vmatpush1.bf16.xpose.msra.mxu0 0
    %1146 = vmatprep.subr.bf16.mxu0 0
    %1147 = vmatpush1.bf16.xpose.msra.mxu0 0
    %1148 = vmatprep.subr.bf16.mxu0 0
    %1149 = vmatpush1.bf16.xpose.msra.mxu0 0
    %1150 = vmatprep.mubr.bf16.mxu0 0
    %1151 = vmatmul.mubr.bf16.gmra.mrb[0].mxu0 %v1113
    %v1152 = vpop.f32.mrb[0].mxu0
    %v1153 = vadd.f32 0.0, %v1152
    %v1154 = vpop.f32.mrb[0].mxu0
    %v1155 = vpop.f32.mrb[0].mxu0
    %v1156 = vpop.f32.mrb[0].mxu0
    %1157 = vdwg.mxu0
    %1158 = vrot.lane.b32.xlu0 %v1013, 96
    %v1159 = vpop.permute.xlu0 %1158
    %v1161 = vsel %vm74, %v1013, 0
    %v1164 = vsel %vm74, %v1159, 0
    %1166 = vmatprep.subr.bf16.mxu0 0
    %1167 = vmatpush1.bf16.xpose.msra.mxu0 %v1164
    %1168 = vmatprep.subr.bf16.mxu0 0
    %1169 = vmatpush1.bf16.xpose.msra.mxu0 0
    %1170 = vmatprep.subr.bf16.mxu0 0
    %1171 = vmatpush1.bf16.xpose.msra.mxu0 0
    %1172 = vmatprep.subr.bf16.mxu0 0
    %1173 = vmatpush1.bf16.xpose.msra.mxu0 0
    %1174 = vmatprep.subr.bf16.mxu0 0
    %1175 = vmatpush1.bf16.xpose.msra.mxu0 0
    %1176 = vmatprep.subr.bf16.mxu0 0
    %1177 = vmatpush1.bf16.xpose.msra.mxu0 0
    %1178 = vmatprep.subr.bf16.mxu0 0
    %1179 = vmatpush1.bf16.xpose.msra.mxu0 0
    %1180 = vmatprep.subr.bf16.mxu0 0
    %1181 = vmatpush1.bf16.xpose.msra.mxu0 0
    %1182 = vmatprep.subr.bf16.mxu0 0
    %1183 = vmatpush1.bf16.xpose.msra.mxu0 0
    %1184 = vmatprep.subr.bf16.mxu0 0
    %1185 = vmatpush1.bf16.xpose.msra.mxu0 0
    %1186 = vmatprep.subr.bf16.mxu0 0
    %1187 = vmatpush1.bf16.xpose.msra.mxu0 0
    %1188 = vmatprep.subr.bf16.mxu0 0
    %1189 = vmatpush1.bf16.xpose.msra.mxu0 0
    %1190 = vmatprep.subr.bf16.mxu0 0
    %1191 = vmatpush1.bf16.xpose.msra.mxu0 0
    %1192 = vmatprep.subr.bf16.mxu0 0
    %1193 = vmatpush1.bf16.xpose.msra.mxu0 0
    %1194 = vmatprep.subr.bf16.mxu0 0
    %1195 = vmatpush1.bf16.xpose.msra.mxu0 0
    %1196 = vmatprep.subr.bf16.mxu0 0
    %1197 = vmatpush1.bf16.xpose.msra.mxu0 0
    %1198 = vmatprep.mubr.bf16.mxu0 0
    %1199 = vmatmul.mubr.bf16.gmra.mrb[0].mxu0 %v1161
    %v1200 = vpop.f32.mrb[0].mxu0
    %v1201 = vadd.f32 0.0, %v1200
    %v1202 = vpop.f32.mrb[0].mxu0
    %v1203 = vpop.f32.mrb[0].mxu0
    %v1204 = vpop.f32.mrb[0].mxu0
    %1205 = vdwg.mxu0
    %v1206 = vsel %vm74, %v1057, -inf
    %1207 = vmax.xlane.f32.xlu0 %v1206
    %v1208 = vpop.xlane.xlu0 %1207
    %v1209 = vsel %vm74, %v1105, -inf
    %1210 = vmax.xlane.f32.xlu0 %v1209
    %v1211 = vpop.xlane.xlu0 %1210
    %v1212 = vsel %vm74, %v1153, -inf
    %1213 = vmax.xlane.f32.xlu0 %v1212
    %v1214 = vpop.xlane.xlu0 %1213
    %v1215 = vsel %vm74, %v1201, -inf
    %1216 = vmax.xlane.f32.xlu0 %v1215
    %v1217 = vpop.xlane.xlu0 %1216
    %v1218 = vsub.f32 %v1057, %v1208
    %v1219 = vsub.f32 %v1105, %v1211
    %v1220 = vsub.f32 %v1153, %v1214
    %v1221 = vsub.f32 %v1201, %v1217
    %v1222 = vmul.f32 %v1218, 1.442695
    %v1223 = vpow.pop %v1222
    %v1224 = vmul.f32 %v1219, 1.442695
    %v1225 = vpow.pop %v1224
    %v1226 = vmul.f32 %v1220, 1.442695
    %v1227 = vpow.pop %v1226
    %v1228 = vmul.f32 %v1221, 1.442695
    %v1229 = vpow.pop %v1228
    %v1230 = vsel %vm74, %v1223, 0.0
    %1231 = vadd.xlane.f32.xlu0 %v1230
    %v1232 = vpop.xlane.xlu0 %1231
    %v1233 = vsel %vm74, %v1225, 0.0
    %1234 = vadd.xlane.f32.xlu0 %v1233
    %v1235 = vpop.xlane.xlu0 %1234
    %v1236 = vsel %vm74, %v1227, 0.0
    %1237 = vadd.xlane.f32.xlu0 %v1236
    %v1238 = vpop.xlane.xlu0 %1237
    %v1239 = vsel %vm74, %v1229, 0.0
    %1240 = vadd.xlane.f32.xlu0 %v1239
    %v1241 = vpop.xlane.xlu0 %1240
    %v1242 = vrcp.pop %v1232
    %v1243 = vrcp.pop %v1235
    %v1244 = vrcp.pop %v1238
    %v1245 = vrcp.pop %v1241
    %v1246 = vmul.f32 %v1223, %v1242
    %v1247 = vmul.f32 %v1225, %v1243
    %v1248 = vmul.f32 %v1227, %v1244
    %v1249 = vmul.f32 %v1229, %v1245
    %v1250 = vpack.c.bf16 %v1246, %v1246
    %v1251 = vpack.c.bf16 %v1247, %v1247
    %v1252 = vpack.c.bf16 %v1248, %v1248
    %v1253 = vpack.c.bf16 %v1249, %v1249
    %1254 = vrot.lane.b32.xlu0 %v1006, 64
    %v1255 = vpop.permute.xlu0 %1254
    %v1257 = vsel %vm74, %v1250, 0
    %v1260 = vsel %vm78, %v1255, 0
    %1262 = vmatprep.subr.bf16.mxu0 0
    %1263 = vmatpush1.bf16.msra.mxu0 %v1260
    %1264 = vmatprep.subr.bf16.mxu0 0
    %1265 = vmatpush1.bf16.msra.mxu0 0
    %1266 = vmatprep.subr.bf16.mxu0 0
    %1267 = vmatpush1.bf16.msra.mxu0 0
    %1268 = vmatprep.subr.bf16.mxu0 0
    %1269 = vmatpush1.bf16.msra.mxu0 0
    %1270 = vmatprep.subr.bf16.mxu0 0
    %1271 = vmatpush1.bf16.msra.mxu0 0
    %1272 = vmatprep.subr.bf16.mxu0 0
    %1273 = vmatpush1.bf16.msra.mxu0 0
    %1274 = vmatprep.subr.bf16.mxu0 0
    %1275 = vmatpush1.bf16.msra.mxu0 0
    %1276 = vmatprep.subr.bf16.mxu0 0
    %1277 = vmatpush1.bf16.msra.mxu0 0
    %1278 = vmatprep.subr.bf16.mxu0 0
    %1279 = vmatpush1.bf16.msra.mxu0 0
    %1280 = vmatprep.subr.bf16.mxu0 0
    %1281 = vmatpush1.bf16.msra.mxu0 0
    %1282 = vmatprep.subr.bf16.mxu0 0
    %1283 = vmatpush1.bf16.msra.mxu0 0
    %1284 = vmatprep.subr.bf16.mxu0 0
    %1285 = vmatpush1.bf16.msra.mxu0 0
    %1286 = vmatprep.subr.bf16.mxu0 0
    %1287 = vmatpush1.bf16.msra.mxu0 0
    %1288 = vmatprep.subr.bf16.mxu0 0
    %1289 = vmatpush1.bf16.msra.mxu0 0
    %1290 = vmatprep.subr.bf16.mxu0 0
    %1291 = vmatpush1.bf16.msra.mxu0 0
    %1292 = vmatprep.subr.bf16.mxu0 0
    %1293 = vmatpush1.bf16.msra.mxu0 0
    %1294 = vmatprep.mubr.bf16.mxu0 0
    %1295 = vmatmul.mubr.bf16.gmra.mrb[0].mxu0 %v1257
    %v1296 = vpop.f32.mrb[0].mxu0
    %v1297 = vadd.f32 0.0, %v1296
    %v1298 = vpop.f32.mrb[0].mxu0
    %v1299 = vpop.f32.mrb[0].mxu0
    %v1300 = vpop.f32.mrb[0].mxu0
    %1301 = vdwg.mxu0
    %1302 = vrot.lane.b32.xlu0 %v1009, 64
    %v1303 = vpop.permute.xlu0 %1302
    %v1305 = vsel %vm74, %v1251, 0
    %v1308 = vsel %vm78, %v1303, 0
    %1310 = vmatprep.subr.bf16.mxu0 0
    %1311 = vmatpush1.bf16.msra.mxu0 %v1308
    %1312 = vmatprep.subr.bf16.mxu0 0
    %1313 = vmatpush1.bf16.msra.mxu0 0
    %1314 = vmatprep.subr.bf16.mxu0 0
    %1315 = vmatpush1.bf16.msra.mxu0 0
    %1316 = vmatprep.subr.bf16.mxu0 0
    %1317 = vmatpush1.bf16.msra.mxu0 0
    %1318 = vmatprep.subr.bf16.mxu0 0
    %1319 = vmatpush1.bf16.msra.mxu0 0
    %1320 = vmatprep.subr.bf16.mxu0 0
    %1321 = vmatpush1.bf16.msra.mxu0 0
    %1322 = vmatprep.subr.bf16.mxu0 0
    %1323 = vmatpush1.bf16.msra.mxu0 0
    %1324 = vmatprep.subr.bf16.mxu0 0
    %1325 = vmatpush1.bf16.msra.mxu0 0
    %1326 = vmatprep.subr.bf16.mxu0 0
    %1327 = vmatpush1.bf16.msra.mxu0 0
    %1328 = vmatprep.subr.bf16.mxu0 0
    %1329 = vmatpush1.bf16.msra.mxu0 0
    %1330 = vmatprep.subr.bf16.mxu0 0
    %1331 = vmatpush1.bf16.msra.mxu0 0
    %1332 = vmatprep.subr.bf16.mxu0 0
    %1333 = vmatpush1.bf16.msra.mxu0 0
    %1334 = vmatprep.subr.bf16.mxu0 0
    %1335 = vmatpush1.bf16.msra.mxu0 0
    %1336 = vmatprep.subr.bf16.mxu0 0
    %1337 = vmatpush1.bf16.msra.mxu0 0
    %1338 = vmatprep.subr.bf16.mxu0 0
    %1339 = vmatpush1.bf16.msra.mxu0 0
    %1340 = vmatprep.subr.bf16.mxu0 0
    %1341 = vmatpush1.bf16.msra.mxu0 0
    %1342 = vmatprep.mubr.bf16.mxu0 0
    %1343 = vmatmul.mubr.bf16.gmra.mrb[0].mxu0 %v1305
    %v1344 = vpop.f32.mrb[0].mxu0
    %v1345 = vadd.f32 0.0, %v1344
    %v1346 = vpop.f32.mrb[0].mxu0
    %v1347 = vpop.f32.mrb[0].mxu0
    %v1348 = vpop.f32.mrb[0].mxu0
    %1349 = vdwg.mxu0
    %1350 = vrot.lane.b32.xlu0 %v1011, 64
    %v1351 = vpop.permute.xlu0 %1350
    %v1353 = vsel %vm74, %v1252, 0
    %v1356 = vsel %vm78, %v1351, 0
    %1358 = vmatprep.subr.bf16.mxu0 0
    %1359 = vmatpush1.bf16.msra.mxu0 %v1356
    %1360 = vmatprep.subr.bf16.mxu0 0
    %1361 = vmatpush1.bf16.msra.mxu0 0
    %1362 = vmatprep.subr.bf16.mxu0 0
    %1363 = vmatpush1.bf16.msra.mxu0 0
    %1364 = vmatprep.subr.bf16.mxu0 0
    %1365 = vmatpush1.bf16.msra.mxu0 0
    %1366 = vmatprep.subr.bf16.mxu0 0
    %1367 = vmatpush1.bf16.msra.mxu0 0
    %1368 = vmatprep.subr.bf16.mxu0 0
    %1369 = vmatpush1.bf16.msra.mxu0 0
    %1370 = vmatprep.subr.bf16.mxu0 0
    %1371 = vmatpush1.bf16.msra.mxu0 0
    %1372 = vmatprep.subr.bf16.mxu0 0
    %1373 = vmatpush1.bf16.msra.mxu0 0
    %1374 = vmatprep.subr.bf16.mxu0 0
    %1375 = vmatpush1.bf16.msra.mxu0 0
    %1376 = vmatprep.subr.bf16.mxu0 0
    %1377 = vmatpush1.bf16.msra.mxu0 0
    %1378 = vmatprep.subr.bf16.mxu0 0
    %1379 = vmatpush1.bf16.msra.mxu0 0
    %1380 = vmatprep.subr.bf16.mxu0 0
    %1381 = vmatpush1.bf16.msra.mxu0 0
    %1382 = vmatprep.subr.bf16.mxu0 0
    %1383 = vmatpush1.bf16.msra.mxu0 0
    %1384 = vmatprep.subr.bf16.mxu0 0
    %1385 = vmatpush1.bf16.msra.mxu0 0
    %1386 = vmatprep.subr.bf16.mxu0 0
    %1387 = vmatpush1.bf16.msra.mxu0 0
    %1388 = vmatprep.subr.bf16.mxu0 0
    %1389 = vmatpush1.bf16.msra.mxu0 0
    %1390 = vmatprep.mubr.bf16.mxu0 0
    %1391 = vmatmul.mubr.bf16.gmra.mrb[0].mxu0 %v1353
    %v1392 = vpop.f32.mrb[0].mxu0
    %v1393 = vadd.f32 0.0, %v1392
    %v1394 = vpop.f32.mrb[0].mxu0
    %v1395 = vpop.f32.mrb[0].mxu0
    %v1396 = vpop.f32.mrb[0].mxu0
    %1397 = vdwg.mxu0
    %1398 = vrot.lane.b32.xlu0 %v1013, 64
    %v1399 = vpop.permute.xlu0 %1398
    %v1401 = vsel %vm74, %v1253, 0
    %v1404 = vsel %vm78, %v1399, 0
    %1406 = vmatprep.subr.bf16.mxu0 0
    %1407 = vmatpush1.bf16.msra.mxu0 %v1404
    %1408 = vmatprep.subr.bf16.mxu0 0
    %1409 = vmatpush1.bf16.msra.mxu0 0
    %1410 = vmatprep.subr.bf16.mxu0 0
    %1411 = vmatpush1.bf16.msra.mxu0 0
    %1412 = vmatprep.subr.bf16.mxu0 0
    %1413 = vmatpush1.bf16.msra.mxu0 0
    %1414 = vmatprep.subr.bf16.mxu0 0
    %1415 = vmatpush1.bf16.msra.mxu0 0
    %1416 = vmatprep.subr.bf16.mxu0 0
    %1417 = vmatpush1.bf16.msra.mxu0 0
    %1418 = vmatprep.subr.bf16.mxu0 0
    %1419 = vmatpush1.bf16.msra.mxu0 0
    %1420 = vmatprep.subr.bf16.mxu0 0
    %1421 = vmatpush1.bf16.msra.mxu0 0
    %1422 = vmatprep.subr.bf16.mxu0 0
    %1423 = vmatpush1.bf16.msra.mxu0 0
    %1424 = vmatprep.subr.bf16.mxu0 0
    %1425 = vmatpush1.bf16.msra.mxu0 0
    %1426 = vmatprep.subr.bf16.mxu0 0
    %1427 = vmatpush1.bf16.msra.mxu0 0
    %1428 = vmatprep.subr.bf16.mxu0 0
    %1429 = vmatpush1.bf16.msra.mxu0 0
    %1430 = vmatprep.subr.bf16.mxu0 0
    %1431 = vmatpush1.bf16.msra.mxu0 0
    %1432 = vmatprep.subr.bf16.mxu0 0
    %1433 = vmatpush1.bf16.msra.mxu0 0
    %1434 = vmatprep.subr.bf16.mxu0 0
    %1435 = vmatpush1.bf16.msra.mxu0 0
    %1436 = vmatprep.subr.bf16.mxu0 0
    %1437 = vmatpush1.bf16.msra.mxu0 0
    %1438 = vmatprep.mubr.bf16.mxu0 0
    %1439 = vmatmul.mubr.bf16.gmra.mrb[0].mxu0 %v1401
    %v1440 = vpop.f32.mrb[0].mxu0
    %v1441 = vadd.f32 0.0, %v1440
    %v1442 = vpop.f32.mrb[0].mxu0
    %v1443 = vpop.f32.mrb[0].mxu0
    %v1444 = vpop.f32.mrb[0].mxu0
    %1445 = vdwg.mxu0
    %1447 = vrot.lane.b32.xlu0 %v1345, 8
    %v1448 = vpop.permute.xlu0 %1447
    %1451 = vrot.lane.b32.xlu0 %v1393, 16
    %v1452 = vpop.permute.xlu0 %1451
    %1455 = vrot.lane.b32.xlu0 %v1441, 24
    %v1456 = vpop.permute.xlu0 %1455
    %v1458 = vsel %vm74, %v1297, %v1448
    %v1459 = vsel %vm134, %v1458, %v1452
    %v1460 = vsel %vm698, %v1459, %v1456
    %v1461 = vpack.c.bf16 %v1460, %v1460
    %v1462 = vld [vmem:[#allocation7 + $0x88] sm:$0xf]
    %v1463 = vld [vmem:[#allocation7 + $0x8c] sm:$0xf]
    %v1464 = vld [vmem:[#allocation7 + $0x90] sm:$0xf]
    %v1465 = vld [vmem:[#allocation7 + $0x94] sm:$0xf]
    %v1466 = vld [vmem:[#allocation8 + $0x6] sm:$0x1]
    %v1467 = vlaneseq
    %v1468 = vshrl.u32 %v1467, 7
    %v1469 = vsub.s32 0, %v1468
    %v1470 = vrot.slane %v1466, %v1469
    %v1475 = vunpack.c.l.b16 %v1462
    %v1476 = vunpack.c.l.b16 %v1463
    %v1477 = vunpack.c.l.b16 %v1464
    %v1478 = vunpack.c.l.b16 %v1465
    %v1479 = vpack.c.b16 %v1476, %v1475
    %v1480 = vpack.c.b16 %v1478, %v1477
    %v1484 = vsel %vm200, %v1461, 0
    %1486 = vmatprep.subr.bf16.mxu0 0
    %1487 = vmatpush1.bf16.msra.mxu0 %v1479
    %1488 = vmatprep.subr.bf16.mxu0 0
    %1489 = vmatpush1.bf16.msra.mxu0 %v1480
    %1490 = vmatprep.subr.bf16.mxu0 0
    %1491 = vmatpush1.bf16.msra.mxu0 0
    %1492 = vmatprep.subr.bf16.mxu0 0
    %1493 = vmatpush1.bf16.msra.mxu0 0
    %1494 = vmatprep.subr.bf16.mxu0 0
    %1495 = vmatpush1.bf16.msra.mxu0 0
    %1496 = vmatprep.subr.bf16.mxu0 0
    %1497 = vmatpush1.bf16.msra.mxu0 0
    %1498 = vmatprep.subr.bf16.mxu0 0
    %1499 = vmatpush1.bf16.msra.mxu0 0
    %1500 = vmatprep.subr.bf16.mxu0 0
    %1501 = vmatpush1.bf16.msra.mxu0 0
    %1502 = vmatprep.subr.bf16.mxu0 0
    %1503 = vmatpush1.bf16.msra.mxu0 0
    %1504 = vmatprep.subr.bf16.mxu0 0
    %1505 = vmatpush1.bf16.msra.mxu0 0
    %1506 = vmatprep.subr.bf16.mxu0 0
    %1507 = vmatpush1.bf16.msra.mxu0 0
    %1508 = vmatprep.subr.bf16.mxu0 0
    %1509 = vmatpush1.bf16.msra.mxu0 0
    %1510 = vmatprep.subr.bf16.mxu0 0
    %1511 = vmatpush1.bf16.msra.mxu0 0
    %1512 = vmatprep.subr.bf16.mxu0 0
    %1513 = vmatpush1.bf16.msra.mxu0 0
    %1514 = vmatprep.subr.bf16.mxu0 0
    %1515 = vmatpush1.bf16.msra.mxu0 0
    %1516 = vmatprep.subr.bf16.mxu0 0
    %1517 = vmatpush1.bf16.msra.mxu0 0
    %1518 = vmatprep.mubr.bf16.mxu0 0
    %1519 = vmatmul.mubr.bf16.gmra.mrb[0].mxu0 %v1484
    %v1520 = vpop.f32.mrb[0].mxu0
    %v1521 = vadd.f32 %v1470, %v1520
    %v1522 = vpop.f32.mrb[0].mxu0
    %v1523 = vpop.f32.mrb[0].mxu0
    %v1524 = vpop.f32.mrb[0].mxu0
    %1525 = vdwg.mxu0
    %v1526 = vpack.c.bf16 %v1521, %v1521
    %v1527 = vld [vmem:[#allocation7 + $0x98] sm:$0xf]
    %v1528 = vld [vmem:[#allocation7 + $0x9c] sm:$0xf]
    %v1529 = vld [vmem:[#allocation7 + $0xa0] sm:$0xf]
    %v1530 = vld [vmem:[#allocation7 + $0xa4] sm:$0xf]
    %v1531 = vld [vmem:[#allocation8 + $0x7] sm:$0x1]
    %v1532 = vlaneseq
    %v1533 = vshrl.u32 %v1532, 7
    %v1534 = vsub.s32 0, %v1533
    %v1535 = vrot.slane %v1531, %v1534
    %v1540 = vunpack.c.l.b16 %v1527
    %v1541 = vunpack.c.l.b16 %v1528
    %v1542 = vunpack.c.l.b16 %v1529
    %v1543 = vunpack.c.l.b16 %v1530
    %v1544 = vpack.c.b16 %v1541, %v1540
    %v1545 = vpack.c.b16 %v1543, %v1542
    %v1549 = vsel %vm200, %v1526, 0
    %1551 = vmatprep.subr.bf16.mxu0 0
    %1552 = vmatpush1.bf16.msra.mxu0 %v1544
    %1553 = vmatprep.subr.bf16.mxu0 0
    %1554 = vmatpush1.bf16.msra.mxu0 %v1545
    %1555 = vmatprep.subr.bf16.mxu0 0
    %1556 = vmatpush1.bf16.msra.mxu0 0
    %1557 = vmatprep.subr.bf16.mxu0 0
    %1558 = vmatpush1.bf16.msra.mxu0 0
    %1559 = vmatprep.subr.bf16.mxu0 0
    %1560 = vmatpush1.bf16.msra.mxu0 0
    %1561 = vmatprep.subr.bf16.mxu0 0
    %1562 = vmatpush1.bf16.msra.mxu0 0
    %1563 = vmatprep.subr.bf16.mxu0 0
    %1564 = vmatpush1.bf16.msra.mxu0 0
    %1565 = vmatprep.subr.bf16.mxu0 0
    %1566 = vmatpush1.bf16.msra.mxu0 0
    %1567 = vmatprep.subr.bf16.mxu0 0
    %1568 = vmatpush1.bf16.msra.mxu0 0
    %1569 = vmatprep.subr.bf16.mxu0 0
    %1570 = vmatpush1.bf16.msra.mxu0 0
    %1571 = vmatprep.subr.bf16.mxu0 0
    %1572 = vmatpush1.bf16.msra.mxu0 0
    %1573 = vmatprep.subr.bf16.mxu0 0
    %1574 = vmatpush1.bf16.msra.mxu0 0
    %1575 = vmatprep.subr.bf16.mxu0 0
    %1576 = vmatpush1.bf16.msra.mxu0 0
    %1577 = vmatprep.subr.bf16.mxu0 0
    %1578 = vmatpush1.bf16.msra.mxu0 0
    %1579 = vmatprep.subr.bf16.mxu0 0
    %1580 = vmatpush1.bf16.msra.mxu0 0
    %1581 = vmatprep.subr.bf16.mxu0 0
    %1582 = vmatpush1.bf16.msra.mxu0 0
    %1583 = vmatprep.mubr.bf16.mxu0 0
    %1584 = vmatmul.mubr.bf16.gmra.mrb[0].mxu0 %v1549
    %v1585 = vpop.f32.mrb[0].mxu0
    %v1586 = vadd.f32 %v1535, %v1585
    %v1587 = vpop.f32.mrb[0].mxu0
    %v1588 = vpop.f32.mrb[0].mxu0
    %v1589 = vpop.f32.mrb[0].mxu0
    %1590 = vdwg.mxu0
    %v1591 = vmax.f32 %v1586, 0.0
    %v1592 = vpack.c.bf16 %v1591, %v1591
    %v1593 = vld [vmem:[#allocation7 + $0xa8] sm:$0xf]
    %v1594 = vld [vmem:[#allocation7 + $0xac] sm:$0xf]
    %v1595 = vld [vmem:[#allocation7 + $0xb0] sm:$0xf]
    %v1596 = vld [vmem:[#allocation7 + $0xb4] sm:$0xf]
    %v1597 = vld [vmem:[#allocation7 + $0xb8] sm:$0xf]
    %v1598 = vld [vmem:[#allocation7 + $0xbc] sm:$0xf]
    %v1599 = vld [vmem:[#allocation7 + $0xc0] sm:$0xf]
    %v1600 = vld [vmem:[#allocation7 + $0xc4] sm:$0xf]
    %v1601 = vld [vmem:[#allocation7 + $0xc8] sm:$0xf]
    %v1602 = vld [vmem:[#allocation7 + $0xcc] sm:$0xf]
    %v1603 = vld [vmem:[#allocation7 + $0xd0] sm:$0xf]
    %v1604 = vld [vmem:[#allocation7 + $0xd4] sm:$0xf]
    %v1605 = vld [vmem:[#allocation7 + $0xd8] sm:$0xf]
    %v1606 = vld [vmem:[#allocation7 + $0xdc] sm:$0xf]
    %v1607 = vld [vmem:[#allocation7 + $0xe0] sm:$0xf]
    %v1608 = vld [vmem:[#allocation7 + $0xe4] sm:$0xf]
    %v1609 = vld [vmem:[#allocation8 + $0x8] sm:$0x1]
    %v1610 = vlaneseq
    %v1611 = vshrl.u32 %v1610, 7
    %v1612 = vsub.s32 0, %v1611
    %v1613 = vrot.slane %v1609, %v1612
    %v1630 = vunpack.c.l.b16 %v1593
    %v1631 = vunpack.c.l.b16 %v1594
    %v1632 = vunpack.c.l.b16 %v1595
    %v1633 = vunpack.c.l.b16 %v1596
    %v1634 = vunpack.c.l.b16 %v1597
    %v1635 = vunpack.c.l.b16 %v1598
    %v1636 = vunpack.c.l.b16 %v1599
    %v1637 = vunpack.c.l.b16 %v1600
    %v1638 = vunpack.c.l.b16 %v1601
    %v1639 = vunpack.c.l.b16 %v1602
    %v1640 = vunpack.c.l.b16 %v1603
    %v1641 = vunpack.c.l.b16 %v1604
    %v1642 = vunpack.c.l.b16 %v1605
    %v1643 = vunpack.c.l.b16 %v1606
    %v1644 = vunpack.c.l.b16 %v1607
    %v1645 = vunpack.c.l.b16 %v1608
    %v1646 = vpack.c.b16 %v1631, %v1630
    %v1647 = vpack.c.b16 %v1633, %v1632
    %v1648 = vpack.c.b16 %v1635, %v1634
    %v1649 = vpack.c.b16 %v1637, %v1636
    %v1650 = vpack.c.b16 %v1639, %v1638
    %v1651 = vpack.c.b16 %v1641, %v1640
    %v1652 = vpack.c.b16 %v1643, %v1642
    %v1653 = vpack.c.b16 %v1645, %v1644
    %1662 = vmatprep.subr.bf16.mxu0 0
    %1663 = vmatpush1.bf16.msra.mxu0 %v1646
    %1664 = vmatprep.subr.bf16.mxu0 0
    %1665 = vmatpush1.bf16.msra.mxu0 %v1647
    %1666 = vmatprep.subr.bf16.mxu0 0
    %1667 = vmatpush1.bf16.msra.mxu0 %v1648
    %1668 = vmatprep.subr.bf16.mxu0 0
    %1669 = vmatpush1.bf16.msra.mxu0 %v1649
    %1670 = vmatprep.subr.bf16.mxu0 0
    %1671 = vmatpush1.bf16.msra.mxu0 %v1650
    %1672 = vmatprep.subr.bf16.mxu0 0
    %1673 = vmatpush1.bf16.msra.mxu0 %v1651
    %1674 = vmatprep.subr.bf16.mxu0 0
    %1675 = vmatpush1.bf16.msra.mxu0 %v1652
    %1676 = vmatprep.subr.bf16.mxu0 0
    %1677 = vmatpush1.bf16.msra.mxu0 %v1653
    %1678 = vmatprep.subr.bf16.mxu0 0
    %1679 = vmatpush1.bf16.msra.mxu0 0
    %1680 = vmatprep.subr.bf16.mxu0 0
    %1681 = vmatpush1.bf16.msra.mxu0 0
    %1682 = vmatprep.subr.bf16.mxu0 0
    %1683 = vmatpush1.bf16.msra.mxu0 0
    %1684 = vmatprep.subr.bf16.mxu0 0
    %1685 = vmatpush1.bf16.msra.mxu0 0
    %1686 = vmatprep.subr.bf16.mxu0 0
    %1687 = vmatpush1.bf16.msra.mxu0 0
    %1688 = vmatprep.subr.bf16.mxu0 0
    %1689 = vmatpush1.bf16.msra.mxu0 0
    %1690 = vmatprep.subr.bf16.mxu0 0
    %1691 = vmatpush1.bf16.msra.mxu0 0
    %1692 = vmatprep.subr.bf16.mxu0 0
    %1693 = vmatpush1.bf16.msra.mxu0 0
    %1694 = vmatprep.mubr.bf16.mxu0 0
    %1695 = vmatmul.mubr.bf16.gmra.mrb[0].mxu0 %v1592
    %v1696 = vpop.f32.mrb[0].mxu0
    %v1697 = vadd.f32 %v1613, %v1696
    %v1698 = vpop.f32.mrb[0].mxu0
    %v1699 = vpop.f32.mrb[0].mxu0
    %v1700 = vpop.f32.mrb[0].mxu0
    %1701 = vdwg.mxu0
    %v1702 = vpack.c.bf16 %v1697, %v1697
    %v1703 = vld [vmem:[#allocation7 + $0xe8] sm:$0xf]
    %v1704 = vld [vmem:[#allocation7 + $0xec] sm:$0xf]
    %v1705 = vld [vmem:[#allocation7 + $0xf0] sm:$0xf]
    %v1706 = vld [vmem:[#allocation7 + $0xf4] sm:$0xf]
    %v1707 = vld [vmem:[#allocation8 + $0x9] sm:$0x1]
    %v1708 = vlaneseq
    %v1709 = vshrl.u32 %v1708, 7
    %v1710 = vsub.s32 0, %v1709
    %v1711 = vrot.slane %v1707, %v1710
    %v1716 = vunpack.c.l.b16 %v1703
    %v1717 = vunpack.c.l.b16 %v1704
    %v1718 = vunpack.c.l.b16 %v1705
    %v1719 = vunpack.c.l.b16 %v1706
    %v1720 = vpack.c.b16 %v1717, %v1716
    %v1721 = vpack.c.b16 %v1719, %v1718
    %v1725 = vsel %vm200, %v1702, 0
    %1727 = vmatprep.subr.bf16.mxu0 0
    %1728 = vmatpush1.bf16.msra.mxu0 %v1720
    %1729 = vmatprep.subr.bf16.mxu0 0
    %1730 = vmatpush1.bf16.msra.mxu0 %v1721
    %1731 = vmatprep.subr.bf16.mxu0 0
    %1732 = vmatpush1.bf16.msra.mxu0 0
    %1733 = vmatprep.subr.bf16.mxu0 0
    %1734 = vmatpush1.bf16.msra.mxu0 0
    %1735 = vmatprep.subr.bf16.mxu0 0
    %1736 = vmatpush1.bf16.msra.mxu0 0
    %1737 = vmatprep.subr.bf16.mxu0 0
    %1738 = vmatpush1.bf16.msra.mxu0 0
    %1739 = vmatprep.subr.bf16.mxu0 0
    %1740 = vmatpush1.bf16.msra.mxu0 0
    %1741 = vmatprep.subr.bf16.mxu0 0
    %1742 = vmatpush1.bf16.msra.mxu0 0
    %1743 = vmatprep.subr.bf16.mxu0 0
    %1744 = vmatpush1.bf16.msra.mxu0 0
    %1745 = vmatprep.subr.bf16.mxu0 0
    %1746 = vmatpush1.bf16.msra.mxu0 0
    %1747 = vmatprep.subr.bf16.mxu0 0
    %1748 = vmatpush1.bf16.msra.mxu0 0
    %1749 = vmatprep.subr.bf16.mxu0 0
    %1750 = vmatpush1.bf16.msra.mxu0 0
    %1751 = vmatprep.subr.bf16.mxu0 0
    %1752 = vmatpush1.bf16.msra.mxu0 0
    %1753 = vmatprep.subr.bf16.mxu0 0
    %1754 = vmatpush1.bf16.msra.mxu0 0
    %1755 = vmatprep.subr.bf16.mxu0 0
    %1756 = vmatpush1.bf16.msra.mxu0 0
    %1757 = vmatprep.subr.bf16.mxu0 0
    %1758 = vmatpush1.bf16.msra.mxu0 0
    %1759 = vmatprep.mubr.bf16.mxu0 0
    %1760 = vmatmul.mubr.bf16.gmra.mrb[0].mxu0 %v1725
    %v1761 = vpop.f32.mrb[0].mxu0
    %v1762 = vadd.f32 %v1711, %v1761
    %v1763 = vpop.f32.mrb[0].mxu0
    %v1764 = vpop.f32.mrb[0].mxu0
    %v1765 = vpop.f32.mrb[0].mxu0
    %1766 = vdwg.mxu0
    %1767 = vst [vmem:[#allocation10] sm:$0xff] %v1762
    // Predicated region
    $region34: #{tpu_custom_call.1} parent=1 // pred_check
      _
    $region35: #{tpu_custom_call.1} parent=1 // pred_check_branch
      %1769 = sbr.rel (0) target = $region37
    $region36: #{tpu_custom_call.1} parent=1 // pred_region
      %s1771 = ssub.s32 128, 128
      %1772 = vsyncadd [#allocation4], %s1771
      %s1774 = sshll.u32 [#allocation10], 4
      %s1775 = int_to_ptr.vmem [resolvable:$true] %s1774
      %1777 = dma.vmem_to_hbm [thread:$0]  %s1775, 128, %s4, [#allocation4]
    $region37: #{tpu_custom_call.1} parent=1 // pred_fallthru
      _
    // Predicated region
    $region38: #{tpu_custom_call.1} parent=1 // pred_check
      _
    $region39: #{tpu_custom_call.1} parent=1 // pred_check_branch
      %1779 = sbr.rel (0) target = $region41
    $region40: #{tpu_custom_call.1} parent=1 // pred_region
      %1780 = dma.done [#allocation4], 128
    $region41: #{tpu_custom_call.1} parent=1 // pred_fallthru
      _
    %1781 = vsyncpa [#allocation3], 1
    %1782 = vsyncpa [#allocation6], 1
    %1783 = vsyncpa [#allocation9], 1
    %1784 = vsyncpa [#allocation4], 1

</llo_original>
